<compile_context>
chip_gen: v6e
topology: v6e:2x2x1
jax: 0.10.0
libtpu: 0.0.40
codegen_flags: <defaults>
</compile_context>

<pallas_src>
import functools

import jax
import jax.numpy as jnp
from jax.experimental import pallas as pl
from jax.experimental.pallas import tpu as pltpu


def _round_up(x, m):
    return ((x + m - 1) // m) * m


def _decoder_last_kernel(qu_ref, bd_ref, bias_ref, k_ref, v_ref,
                         out_ref, probs_ref, inv_ref,
                         denom_sc, acc_sc, *, clip, d_model):
    s = pl.program_id(1)

    @pl.when(s == 0)
    def _():
        denom_sc[...] = jnp.zeros_like(denom_sc)
        acc_sc[...] = jnp.zeros_like(acc_sc)

    # AC for this key tile: contracting-last-dims batched matmul, operands in the
    # streamed dtype (no block-wide upcast copies), f32 accumulation on the MXU.
    qu = qu_ref[...][:, None, :].astype(k_ref.dtype)                     # (TB, 1, D)
    ac = jnp.einsum('bqd,bkd->bqk', qu, k_ref[...],
                    preferred_element_type=jnp.float32)[:, 0, :]         # (TB, TS)

    inv_sqrt_d = 1.0 / (float(d_model) ** 0.5)
    scores = (ac + bd_ref[...]) * inv_sqrt_d
    scores = clip * jnp.tanh(scores) + bias_ref[...]                     # bias = 0 / -1e9

    # Unmasked scores are in [-clip, clip] -> fixed max = clip (no row-reduce, no
    # online-softmax rescaling). Masked entries sit near -1e9 and underflow to 0.
    e = jnp.exp(scores - clip)                                           # (TB, TS)
    probs_ref[...] = e                                                   # unnormalized

    denom_sc[...] += jnp.sum(e, axis=-1, keepdims=True)                  # (TB, 1)
    acc_sc[...] += jnp.einsum('bqk,bkd->bqd',
                              e[:, None, :].astype(v_ref.dtype), v_ref[...],
                              preferred_element_type=jnp.float32)[:, 0, :]  # (TB, D)

    @pl.when(s == pl.num_programs(1) - 1)
    def _():
        # Guard fully-masked / padded batch rows (denom == 0) -> their probs stay 0.
        inv = 1.0 / jnp.maximum(denom_sc[...], jnp.float32(1e-30))       # (TB, 1)
        out_ref[...] = (acc_sc[...] * inv).astype(out_ref.dtype)
        inv_ref[...] = jnp.broadcast_to(inv, inv_ref.shape)


def decoder_last_layer(h_t, K_a, V_a, r, mask, params, *, clip):
    B, D = h_t.shape
    S = K_a.shape[1]
    f32 = jnp.float32

    # ---- Hoisted tiny / batch-invariant GEMMs (run once in plain XLA) --------------
    Wq = params["Wq"].astype(f32)
    bq = params["bq"].astype(f32)
    Wr = params["Wr"].astype(f32)
    br = params["br"].astype(f32)
    u = params["u"].astype(f32)
    v = params["v"].astype(f32)

    q = h_t.astype(f32) @ Wq.T + bq                       # (B, D)
    r_proj = r.astype(f32) @ Wr.T + br                    # (S, D)
    qu = q + u                                            # (B, D)
    bd = (q + v) @ r_proj.T                               # (B, S)
    bias = jnp.where(mask.astype(bool), f32(-1e9), f32(0.0))  # additive mask (B, S)

    # ---- Tile sizing (generation-aware) --------------------------------------------
    TB = min(128, _round_up(B, 8))
    if B > 8 and _round_up(B, TB) // TB < 2:
        # Keep >=2 batch blocks so "parallel" actually feeds both v7x TensorCores.
        TB = max(8, _round_up((B + 1) // 2, 8))
    B_pad = _round_up(B, TB)
    D_pad = _round_up(D, 128)
    S_pad = _round_up(S, 128)
    kv_bytes = jnp.dtype(K_a.dtype).itemsize

    try:
        info = pltpu.get_tpu_info()
        vmem_cap = int(getattr(info, "vmem_capacity_bytes", 64 * 1024 * 1024))
    except Exception:  # pragma: no cover - interpret/CPU fallback
        vmem_cap = 64 * 1024 * 1024
    budget = int(0.55 * vmem_cap)

    def _step_bytes(tb, ts):
        return (2 * tb * D_pad * 4                      # qu
                + 2 * 2 * tb * ts * 4                   # bd + bias
                + 2 * 2 * tb * ts * D_pad * kv_bytes    # K, V (double-buffered)
                + 2 * tb * D_pad * 4                    # h_out
                + 2 * tb * ts * 4                       # probs (unnormalized) block
                + 2 * tb * 128 * 4                      # 1/denom block
                + tb * (D_pad + 128) * 4)               # scratch acc + denom

    prefs = ([S_pad] if S_pad <= 1024 else []) + [c for c in (512, 256, 128) if c < S_pad]
    TS = 128
    for cand in prefs:
        if S_pad % cand == 0 and _step_bytes(TB, cand) <= budget:
            TS = cand
            break
    while TB > 8 and _step_bytes(TB, TS) > budget:
        TB = max(8, (TB // 2 + 7) // 8 * 8)
    B_pad = _round_up(B, TB)

    step_bytes = _step_bytes(TB, TS)
    vmem_limit = int(min(0.85 * vmem_cap, max(1.5 * step_bytes, 16 * 1024 * 1024)))

    # ---- Padding (K/V keep the caller's dtype; only pad when actually needed) -------
    def _pad2(x, rows, cols, fill=0.0):
        if x.shape == (rows, cols):
            return x
        return jnp.pad(x, ((0, rows - x.shape[0]), (0, cols - x.shape[1])),
                       constant_values=fill)

    def _pad3(x, b, s, d):
        if x.shape == (b, s, d):
            return x
        return jnp.pad(x, ((0, b - x.shape[0]), (0, s - x.shape[1]), (0, d - x.shape[2])))

    qu_p = _pad2(qu, B_pad, D_pad)
    bd_p = _pad2(bd, B_pad, S_pad)
    bias_p = _pad2(bias, B_pad, S_pad, fill=-1e9)   # padded keys / batch rows: masked
    K_p = _pad3(K_a, B_pad, S_pad, D_pad)
    V_p = _pad3(V_a, B_pad, S_pad, D_pad)

    kernel = functools.partial(_decoder_last_kernel, clip=float(clip), d_model=D)
    grid = (B_pad // TB, S_pad // TS)

    out_p, probs_un_p, inv_p = pl.pallas_call(
        kernel,
        out_shape=(jax.ShapeDtypeStruct((B_pad, D_pad), f32),
                   jax.ShapeDtypeStruct((B_pad, S_pad), f32),
                   jax.ShapeDtypeStruct((B_pad, 128), f32)),
        grid_spec=pltpu.PrefetchScalarGridSpec(
            num_scalar_prefetch=0,
            grid=grid,
            in_specs=[
                pl.BlockSpec((TB, D_pad), lambda b, s: (b, 0)),            # q + u
                pl.BlockSpec((TB, TS), lambda b, s: (b, s)),               # BD tile
                pl.BlockSpec((TB, TS), lambda b, s: (b, s)),               # mask bias
                pl.BlockSpec((TB, TS, D_pad), lambda b, s: (b, s, 0)),     # K tile
                pl.BlockSpec((TB, TS, D_pad), lambda b, s: (b, s, 0)),     # V tile
            ],
            out_specs=[
                pl.BlockSpec((TB, D_pad), lambda b, s: (b, 0)),            # h_out
                pl.BlockSpec((TB, TS), lambda b, s: (b, s)),               # probs (unnorm)
                pl.BlockSpec((TB, 128), lambda b, s: (b, 0)),              # 1/denom
            ],
            scratch_shapes=[pltpu.VMEM((TB, 1), f32),        # running denom
                            pltpu.VMEM((TB, D_pad), f32)],   # running probs @ V
        ),
        compiler_params=pltpu.CompilerParams(
            dimension_semantics=("parallel", "arbitrary"),
            vmem_limit_bytes=vmem_limit),
    )(qu_p, bd_p, bias_p, K_p, V_p)

    # Final (exact) normalization of the user-visible probs: negligible extra traffic
    # compared to the K/V stream (factor ~4 / (D * kv_bytes)).
    probs = probs_un_p[:B, :S] * inv_p[:B, :1]
    return out_p[:B, :D], probs


def decoder_last_layer_ref(h_t, K_a, V_a, r, mask, params, *, clip):
    """Pure-JAX reference for correctness checking."""
    D = h_t.shape[-1]
    q = h_t @ params["Wq"].T + params["bq"]              # (B, D)
    r_proj = r @ params["Wr"].T + params["br"]           # (S, D)
    ac = jnp.einsum("bd,bsd->bs", q + params["u"], K_a)
    bd = jnp.einsum("bd,sd->bs", q + params["v"], r_proj)
    scores = (ac + bd) / jnp.sqrt(jnp.float32(D))
    scores = clip * jnp.tanh(scores)
    scores = jnp.where(mask, -1e9, scores)
    probs = jax.nn.softmax(scores, axis=-1)
    out = jnp.einsum("bs,bsd->bd", probs, V_a)
    return out, probs


def init_params(key, d_model):
    ks = jax.random.split(key, 10)
    scale = 1.0 / jnp.sqrt(jnp.float32(d_model))
    params = {
        "Wq": jax.random.normal(ks[0], (d_model, d_model), jnp.float32) * scale,
        "bq": jax.random.normal(ks[1], (1, d_model), jnp.float32) * 0.01,
        "Wr": jax.random.normal(ks[2], (d_model, d_model), jnp.float32) * scale,
        "br": jax.random.normal(ks[3], (1, d_model), jnp.float32) * 0.01,
        "u": jax.random.normal(ks[4], (1, d_model), jnp.float32),
        "v": jax.random.normal(ks[5], (1, d_model), jnp.float32),
        # Created for __init__ fidelity; unused by forward (matches PyTorch module).
        "Wk": jax.random.normal(ks[6], (d_model, d_model), jnp.float32) * scale,
        "bk": jnp.zeros((1, d_model), jnp.float32),
        "Wv": jax.random.normal(ks[7], (d_model, d_model), jnp.float32) * scale,
        "bv": jnp.zeros((1, d_model), jnp.float32),
    }
    return params


if __name__ == "__main__":
    B, S, D = 2, 8, 32
    clip = 10.0

    key = jax.random.PRNGKey(0)
    kp, kh, kk, kv, kr = jax.random.split(key, 5)

    params = init_params(kp, D)
    h_t = jax.random.normal(kh, (B, D), jnp.float32)
    K_a = jax.random.normal(kk, (B, S, D), jnp.float32)
    V_a = jax.random.normal(kv, (B, S, D), jnp.float32)
    r = jax.random.normal(kr, (S, D), jnp.float32)
    # Mask out the last two source positions of batch 0, last one of batch 1.
    mask = jnp.array(
        [[False] * (S - 2) + [True, True],
         [False] * (S - 1) + [True]], dtype=bool)

    out, probs = decoder_last_layer(h_t, K_a, V_a, r, mask, params, clip=clip)
    out, probs = jax.block_until_ready((out, probs))

    out_want, probs_want = decoder_last_layer_ref(h_t, K_a, V_a, r, mask, params,
                                                  clip=clip)

    assert out.shape == (B, D) and probs.shape == (B, S), "shape mismatch"
    assert jnp.allclose(out, out_want, atol=2e-3, rtol=2e-3), "h_t mismatch"
    assert jnp.allclose(probs, probs_want, atol=2e-3, rtol=2e-3), "probs mismatch"
    assert bool(jnp.all(probs[:, -1] < 1e-6)), "mask not applied"

    print("KERNEL_OK")
</pallas_src>

<mosaic_0001>
module attributes {stable_mosaic.version = 11 : i64} {
  func.func @_decoder_last_kernel(%arg0: i32, %arg1: i32, %arg2: memref<8x128xf32, #tpu.memory_space<vmem>>, %arg3: memref<8x128xf32, #tpu.memory_space<vmem>>, %arg4: memref<8x128xf32, #tpu.memory_space<vmem>>, %arg5: memref<8x128x128xf32, #tpu.memory_space<vmem>>, %arg6: memref<8x128x128xf32, #tpu.memory_space<vmem>>, %arg7: memref<8x128xf32, #tpu.memory_space<vmem>>, %arg8: memref<8x128xf32, #tpu.memory_space<vmem>>, %arg9: memref<8x128xf32, #tpu.memory_space<vmem>>, %arg10: memref<8x1xf32, #tpu.memory_space<vmem>>, %arg11: memref<8x128xf32, #tpu.memory_space<vmem>>) attributes {dimension_semantics = [#tpu.dimension_semantics<parallel>, #tpu.dimension_semantics<arbitrary>], iteration_bounds = array<i64: 1, 1>, scalar_prefetch = 0 : i64, scratch_operands = 2 : i64, tpu.core_type = #tpu.core_type<tc>, window_params = [{transform_indices = @transform_0, window_bounds = array<i64: 8, 128>}, {transform_indices = @transform_1, window_bounds = array<i64: 8, 128>}, {transform_indices = @transform_2, window_bounds = array<i64: 8, 128>}, {transform_indices = @transform_3, window_bounds = array<i64: 8, 128, 128>}, {transform_indices = @transform_4, window_bounds = array<i64: 8, 128, 128>}, {transform_indices = @transform_5, window_bounds = array<i64: 8, 128>}, {transform_indices = @transform_6, window_bounds = array<i64: 8, 128>}, {transform_indices = @transform_7, window_bounds = array<i64: 8, 128>}]} {
    %c0_i32 = arith.constant 0 : i32
    %0 = arith.cmpi eq, %arg1, %c0_i32 : i32
    %1 = arith.extui %0 : i1 to i32
    %c0_i32_0 = arith.constant 0 : i32
    %2 = arith.cmpi ne, %1, %c0_i32_0 : i32
    scf.if %2 {
      %cst_29 = arith.constant 0.000000e+00 : f32
      %36 = vector.broadcast %cst_29 : f32 to vector<8x1xf32>
      %c0_30 = arith.constant 0 : index
      %c0_31 = arith.constant 0 : index
      %37 = vector.load %arg10[%c0_30, %c0_31] : memref<8x1xf32, #tpu.memory_space<vmem>>, vector<8x1xf32>
      tpu.vector_store %arg10[%c0_30, %c0_31], %36 {strides = array<i32>} : memref<8x1xf32, #tpu.memory_space<vmem>>, vector<8x1xf32>,
      %cst_32 = arith.constant 0.000000e+00 : f32
      %38 = vector.broadcast %cst_32 : f32 to vector<8x128xf32>
      %c0_33 = arith.constant 0 : index
      %c0_34 = arith.constant 0 : index
      %39 = vector.load %arg11[%c0_33, %c0_34] : memref<8x128xf32, #tpu.memory_space<vmem>>, vector<8x128xf32>
      tpu.vector_store %arg11[%c0_33, %c0_34], %38 {strides = array<i32>} : memref<8x128xf32, #tpu.memory_space<vmem>>, vector<8x128xf32>,
    } else {
    }
    %c0 = arith.constant 0 : index
    %c0_1 = arith.constant 0 : index
    %3 = vector.load %arg2[%c0, %c0_1] : memref<8x128xf32, #tpu.memory_space<vmem>>, vector<8x128xf32>
    %4 = vector.shape_cast %3 : vector<8x128xf32> to vector<8x1x128xf32>
    %c0_2 = arith.constant 0 : index
    %c0_3 = arith.constant 0 : index
    %c0_4 = arith.constant 0 : index
    %5 = vector.load %arg5[%c0_2, %c0_3, %c0_4] : memref<8x128x128xf32, #tpu.memory_space<vmem>>, vector<8x128x128xf32>
    "tpu.trace_start"() <{level = 10 : i32, message = "bqd,bkd->bqk"}> : () -> ()
    %cst = arith.constant dense<0.000000e+00> : vector<8x1x128xf32>
    %6 = tpu.matmul %4, %5, %cst {dimension_numbers = #tpu.dot_dimension_numbers<[2], [2], [1], [1], [0, 0, 0, 1, 1, 1], [0], [0]>} : vector<8x1x128xf32>, vector<8x128x128xf32>, vector<8x1x128xf32> -> vector<8x1x128xf32>
    "tpu.trace_stop"() : () -> ()
    %7 = vector.shape_cast %6 : vector<8x1x128xf32> to vector<8x128xf32>
    %c0_5 = arith.constant 0 : index
    %c0_6 = arith.constant 0 : index
    %8 = vector.load %arg3[%c0_5, %c0_6] : memref<8x128xf32, #tpu.memory_space<vmem>>, vector<8x128xf32>
    %9 = arith.addf %7, %8 : vector<8x128xf32>
    %cst_7 = arith.constant 0.176776692 : f32
    %10 = vector.broadcast %cst_7 : f32 to vector<8x128xf32>
    %11 = arith.mulf %9, %10 : vector<8x128xf32>
    %12 = math.tanh %11 : vector<8x128xf32>
    %cst_8 = arith.constant 1.000000e+01 : f32
    %13 = vector.broadcast %cst_8 : f32 to vector<8x128xf32>
    %14 = arith.mulf %13, %12 : vector<8x128xf32>
    %c0_9 = arith.constant 0 : index
    %c0_10 = arith.constant 0 : index
    %15 = vector.load %arg4[%c0_9, %c0_10] : memref<8x128xf32, #tpu.memory_space<vmem>>, vector<8x128xf32>
    %16 = arith.addf %14, %15 : vector<8x128xf32>
    %cst_11 = arith.constant 1.000000e+01 : f32
    %17 = vector.broadcast %cst_11 : f32 to vector<8x128xf32>
    %18 = arith.subf %16, %17 : vector<8x128xf32>
    %19 = math.exp %18 : vector<8x128xf32>
    %c0_12 = arith.constant 0 : index
    %c0_13 = arith.constant 0 : index
    %20 = vector.load %arg8[%c0_12, %c0_13] : memref<8x128xf32, #tpu.memory_space<vmem>>, vector<8x128xf32>
    tpu.vector_store %arg8[%c0_12, %c0_13], %19 {strides = array<i32>} : memref<8x128xf32, #tpu.memory_space<vmem>>, vector<8x128xf32>,
    %c0_14 = arith.constant 0 : index
    %c0_15 = arith.constant 0 : index
    %21 = vector.load %arg10[%c0_14, %c0_15] : memref<8x1xf32, #tpu.memory_space<vmem>>, vector<8x1xf32>
    %cst_16 = arith.constant dense<0.000000e+00> : vector<8xf32>
    %22 = vector.multi_reduction <add>, %19, %cst_16 [1] : vector<8x128xf32> to vector<8xf32>
    %23 = vector.shape_cast %22 : vector<8xf32> to vector<8x1xf32>
    %24 = arith.addf %21, %23 : vector<8x1xf32>
    %c0_17 = arith.constant 0 : index
    %c0_18 = arith.constant 0 : index
    %25 = vector.load %arg10[%c0_17, %c0_18] : memref<8x1xf32, #tpu.memory_space<vmem>>, vector<8x1xf32>
    tpu.vector_store %arg10[%c0_17, %c0_18], %24 {strides = array<i32>} : memref<8x1xf32, #tpu.memory_space<vmem>>, vector<8x1xf32>,
    %c0_19 = arith.constant 0 : index
    %c0_20 = arith.constant 0 : index
    %26 = vector.load %arg11[%c0_19, %c0_20] : memref<8x128xf32, #tpu.memory_space<vmem>>, vector<8x128xf32>
    %27 = vector.shape_cast %19 : vector<8x128xf32> to vector<8x1x128xf32>
    %c0_21 = arith.constant 0 : index
    %c0_22 = arith.constant 0 : index
    %c0_23 = arith.constant 0 : index
    %28 = vector.load %arg6[%c0_21, %c0_22, %c0_23] : memref<8x128x128xf32, #tpu.memory_space<vmem>>, vector<8x128x128xf32>
    "tpu.trace_start"() <{level = 10 : i32, message = "bqk,bkd->bqd"}> : () -> ()
    %cst_24 = arith.constant dense<0.000000e+00> : vector<8x1x128xf32>
    %29 = tpu.matmul %27, %28, %cst_24 {dimension_numbers = #tpu.dot_dimension_numbers<[2], [1], [1], [2], [0, 0, 0, 1, 1, 2], [0], [0]>} : vector<8x1x128xf32>, vector<8x128x128xf32>, vector<8x1x128xf32> -> vector<8x1x128xf32>
    "tpu.trace_stop"() : () -> ()
    %30 = vector.shape_cast %29 : vector<8x1x128xf32> to vector<8x128xf32>
    %31 = arith.addf %26, %30 : vector<8x128xf32>
    %c0_25 = arith.constant 0 : index
    %c0_26 = arith.constant 0 : index
    %32 = vector.load %arg11[%c0_25, %c0_26] : memref<8x128xf32, #tpu.memory_space<vmem>>, vector<8x128xf32>
    tpu.vector_store %arg11[%c0_25, %c0_26], %31 {strides = array<i32>} : memref<8x128xf32, #tpu.memory_space<vmem>>, vector<8x128xf32>,
    %c0_i32_27 = arith.constant 0 : i32
    %33 = arith.cmpi eq, %arg1, %c0_i32_27 : i32
    %34 = arith.extui %33 : i1 to i32
    %c0_i32_28 = arith.constant 0 : i32
    %35 = arith.cmpi ne, %34, %c0_i32_28 : i32
    scf.if %35 {
      %c0_29 = arith.constant 0 : index
      %c0_30 = arith.constant 0 : index
      %36 = vector.load %arg10[%c0_29, %c0_30] : memref<8x1xf32, #tpu.memory_space<vmem>>, vector<8x1xf32>
      %cst_31 = arith.constant 1.000000e-30 : f32
      %37 = vector.broadcast %cst_31 : f32 to vector<8x1xf32>
      %38 = arith.maximumf %36, %37 : vector<8x1xf32>
      %cst_32 = arith.constant 1.000000e+00 : f32
      %39 = vector.broadcast %cst_32 : f32 to vector<8x1xf32>
      %40 = arith.divf %39, %38 : vector<8x1xf32>
      %c0_33 = arith.constant 0 : index
      %c0_34 = arith.constant 0 : index
      %41 = vector.load %arg11[%c0_33, %c0_34] : memref<8x128xf32, #tpu.memory_space<vmem>>, vector<8x128xf32>
      %42 = vector.broadcast %40 : vector<8x1xf32> to vector<8x128xf32>
      %43 = arith.mulf %41, %42 : vector<8x128xf32>
      %c0_35 = arith.constant 0 : index
      %c0_36 = arith.constant 0 : index
      %44 = vector.load %arg7[%c0_35, %c0_36] : memref<8x128xf32, #tpu.memory_space<vmem>>, vector<8x128xf32>
      tpu.vector_store %arg7[%c0_35, %c0_36], %43 {strides = array<i32>} : memref<8x128xf32, #tpu.memory_space<vmem>>, vector<8x128xf32>,
      %45 = vector.shape_cast %40 : vector<8x1xf32> to vector<8x1xf32>
      %46 = vector.broadcast %45 : vector<8x1xf32> to vector<8x128xf32>
      %c0_37 = arith.constant 0 : index
      %c0_38 = arith.constant 0 : index
      %47 = vector.load %arg9[%c0_37, %c0_38] : memref<8x128xf32, #tpu.memory_space<vmem>>, vector<8x128xf32>
      tpu.vector_store %arg9[%c0_37, %c0_38], %46 {strides = array<i32>} : memref<8x128xf32, #tpu.memory_space<vmem>>, vector<8x128xf32>,
    } else {
    }
    return
  }
  func.func @transform_0(%arg0: i32, %arg1: i32) -> (i32, i32) {
    %c0_i32 = arith.constant 0 : i32
    %c0_i32_0 = arith.constant 0 : i32
    return %arg0, %c0_i32 : i32, i32
  }
  func.func @transform_1(%arg0: i32, %arg1: i32) -> (i32, i32) {
    %c0_i32 = arith.constant 0 : i32
    return %arg0, %arg1 : i32, i32
  }
  func.func @transform_2(%arg0: i32, %arg1: i32) -> (i32, i32) {
    %c0_i32 = arith.constant 0 : i32
    return %arg0, %arg1 : i32, i32
  }
  func.func @transform_3(%arg0: i32, %arg1: i32) -> (i32, i32, i32) {
    %c0_i32 = arith.constant 0 : i32
    %c0_i32_0 = arith.constant 0 : i32
    return %arg0, %arg1, %c0_i32 : i32, i32, i32
  }
  func.func @transform_4(%arg0: i32, %arg1: i32) -> (i32, i32, i32) {
    %c0_i32 = arith.constant 0 : i32
    %c0_i32_0 = arith.constant 0 : i32
    return %arg0, %arg1, %c0_i32 : i32, i32, i32
  }
  func.func @transform_5(%arg0: i32, %arg1: i32) -> (i32, i32) {
    %c0_i32 = arith.constant 0 : i32
    %c0_i32_0 = arith.constant 0 : i32
    return %arg0, %c0_i32 : i32, i32
  }
  func.func @transform_6(%arg0: i32, %arg1: i32) -> (i32, i32) {
    %c0_i32 = arith.constant 0 : i32
    return %arg0, %arg1 : i32, i32
  }
  func.func @transform_7(%arg0: i32, %arg1: i32) -> (i32, i32) {
    %c0_i32 = arith.constant 0 : i32
    %c0_i32_0 = arith.constant 0 : i32
    return %arg0, %c0_i32 : i32, i32
  }
}

</mosaic_0001>

<llo_original>
// kernel: tpu_custom_call.1
$region0: #{tpu_custom_call.1}
  #allocation0 [shape = 'u32[]', space=smem, size = 0x4, offset = 0x4, fixed_abs, tag = 'smem constant byte address 0x4 - core index']
  #allocation1 [shape = 'u32[144,128]{1,0:T(1,128)}', space=vmem, size = 0x12000, scoped, tag = 'internal scratch']
  #allocation2 [shape = 'f32[8,1]{1,0:T(8,128)}', space=vmem, size = 0x1000, scoped, tag = 'scratch operand']
  #allocation3 [shape = 'f32[8,128]{1,0:T(8,128)}', space=vmem, size = 0x1000, scoped, tag = 'scratch operand']
  %s0 = inlined_call_operand.hbm [shape: f32[8,128], index: 0, kind: input, shape index: {}]
  %s1 = inlined_call_operand.hbm [shape: f32[8,128], index: 1, kind: input, shape index: {}]
  %s2 = inlined_call_operand.hbm [shape: f32[8,128], index: 2, kind: input, shape index: {}]
  %s3 = inlined_call_operand.hbm [shape: f32[8,128,128], index: 3, kind: input, shape index: {}]
  %s4 = inlined_call_operand.hbm [shape: f32[8,128,128], index: 4, kind: input, shape index: {}]
  %s5 = inlined_call_operand.hbm [shape: f32[8,128], index: 5, kind: output, shape index: {0}]
  %s6 = inlined_call_operand.hbm [shape: f32[8,128], index: 6, kind: output, shape index: {1}]
  %s7 = inlined_call_operand.hbm [shape: f32[8,128], index: 7, kind: output, shape index: {2}]
  %8 = xla_tuple %s5, %s6, %s7
  %s9 = sld [smem:[#allocation0]]
  $region74: #{tpu_custom_call.1} parent=0
    _
  %s11 = ssub.s32 1, %s9
  %s12 = scalar_select 0, %s11, %s9
  $region1: #{tpu_custom_call.1} parent=0
    #allocation4 [shape = 'u8[4096]{0}', space=vmem, size = 0x1000, scoped, tag = 'input window, operand 0, single buffered']
    #allocation5 [shape = 's32[1]{0}', space=sflag, size = 0x4, scoped, tag = 'scoped memory for tpu_custom_call.1']
    #allocation6 [shape = 's32[1]{0}', space=sflag, size = 0x4, scoped, tag = 'scoped memory for tpu_custom_call.1']
    #allocation7 [shape = 'u8[4096]{0}', space=vmem, size = 0x1000, scoped, tag = 'input window, operand 1, single buffered']
    #allocation8 [shape = 's32[1]{0}', space=sflag, size = 0x4, scoped, tag = 'scoped memory for tpu_custom_call.1']
    #allocation9 [shape = 'u8[4096]{0}', space=vmem, size = 0x1000, scoped, tag = 'input window, operand 2, single buffered']
    #allocation10 [shape = 'u8[524288]{0}', space=vmem, size = 0x80000, scoped, tag = 'input window, operand 3, single buffered']
    #allocation11 [shape = 's32[1]{0}', space=sflag, size = 0x4, scoped, tag = 'scoped memory for tpu_custom_call.1']
    #allocation12 [shape = 'u8[524288]{0}', space=vmem, size = 0x80000, scoped, tag = 'input window, operand 4, single buffered']
    #allocation13 [shape = 'u8[4096]{0}', space=vmem, size = 0x1000, scoped, tag = 'output window, operand 0, single buffered']
    #allocation14 [shape = 'u8[4096]{0}', space=vmem, size = 0x1000, scoped, tag = 'output window, operand 1, single buffered']
    #allocation15 [shape = 's32[1]{0}', space=sflag, size = 0x4, scoped, tag = 'scoped memory for tpu_custom_call.1']
    #allocation16 [shape = 'u8[4096]{0}', space=vmem, size = 0x1000, scoped, tag = 'output window, operand 2, single buffered']
    %13 = vsyncpa [#allocation5], 0
    %14 = vsyncpa [#allocation8], 0
    %15 = vsyncpa [#allocation11], 0
    %16 = vsyncpa [#allocation6], 0
    %17 = vsyncpa [#allocation15], 0
    // Predicated region
    $region2: #{tpu_custom_call.1} parent=1 // pred_check
      _
    $region3: #{tpu_custom_call.1} parent=1 // pred_check_branch
      %19 = sbr.rel (0) target = $region5
    $region4: #{tpu_custom_call.1} parent=1 // pred_region
      %s21 = ssub.s32 128, 128
      %22 = vsyncadd [#allocation5], %s21
      %s24 = sshll.u32 [#allocation4], 4
      %s25 = int_to_ptr.vmem [resolvable:$true] %s24
      %27 = dma.hbm_to_vmem [thread:$0]  %s0, 128, %s25, [#allocation5]
    $region5: #{tpu_custom_call.1} parent=1 // pred_fallthru
      _
    // Predicated region
    $region6: #{tpu_custom_call.1} parent=1 // pred_check
      _
    $region7: #{tpu_custom_call.1} parent=1 // pred_check_branch
      %29 = sbr.rel (0) target = $region9
    $region8: #{tpu_custom_call.1} parent=1 // pred_region
      %s31 = ssub.s32 128, 128
      %32 = vsyncadd [#allocation8], %s31
      %s34 = sshll.u32 [#allocation7], 4
      %s35 = int_to_ptr.vmem [resolvable:$true] %s34
      %37 = dma.hbm_to_vmem [thread:$0]  %s1, 128, %s35, [#allocation8]
    $region9: #{tpu_custom_call.1} parent=1 // pred_fallthru
      _
    // Predicated region
    $region10: #{tpu_custom_call.1} parent=1 // pred_check
      _
    $region11: #{tpu_custom_call.1} parent=1 // pred_check_branch
      %39 = sbr.rel (0) target = $region13
    $region12: #{tpu_custom_call.1} parent=1 // pred_region
      %s41 = ssub.s32 128, 128
      %42 = vsyncadd [#allocation8], %s41
      %s44 = sshll.u32 [#allocation9], 4
      %s45 = int_to_ptr.vmem [resolvable:$true] %s44
      %47 = dma.hbm_to_vmem [thread:$0]  %s2, 128, %s45, [#allocation8]
    $region13: #{tpu_custom_call.1} parent=1 // pred_fallthru
      _
    // Predicated region
    $region14: #{tpu_custom_call.1} parent=1 // pred_check
      _
    $region15: #{tpu_custom_call.1} parent=1 // pred_check_branch
      %49 = sbr.rel (0) target = $region17
    $region16: #{tpu_custom_call.1} parent=1 // pred_region
      %s51 = ssub.s32 16384, 16384
      %52 = vsyncadd [#allocation11], %s51
      %s53 = sshll.u32 [#allocation10], 4
      %s54 = int_to_ptr.vmem [resolvable:$true] %s53
      %59 = dma.hbm_to_vmem [thread:$0]  %s3, 16384, %s54, [#allocation11], 128, 128, 8
    $region17: #{tpu_custom_call.1} parent=1 // pred_fallthru
      _
    // Predicated region
    $region18: #{tpu_custom_call.1} parent=1 // pred_check
      _
    $region19: #{tpu_custom_call.1} parent=1 // pred_check_branch
      %61 = sbr.rel (0) target = $region21
    $region20: #{tpu_custom_call.1} parent=1 // pred_region
      %s63 = ssub.s32 16384, 16384
      %64 = vsyncadd [#allocation11], %s63
      %s65 = sshll.u32 [#allocation12], 4
      %s66 = int_to_ptr.vmem [resolvable:$true] %s65
      %71 = dma.hbm_to_vmem [thread:$0]  %s4, 16384, %s66, [#allocation11], 128, 128, 8
    $region21: #{tpu_custom_call.1} parent=1 // pred_fallthru
      _
    // Predicated region
    $region22: #{tpu_custom_call.1} parent=1 // pred_check
      _
    $region23: #{tpu_custom_call.1} parent=1 // pred_check_branch
      %73 = sbr.rel (0) target = $region25
    $region24: #{tpu_custom_call.1} parent=1 // pred_region
      %74 = dma.done [#allocation5], 128
    $region25: #{tpu_custom_call.1} parent=1 // pred_fallthru
      _
    // Predicated region
    $region26: #{tpu_custom_call.1} parent=1 // pred_check
      _
    $region27: #{tpu_custom_call.1} parent=1 // pred_check_branch
      %76 = sbr.rel (0) target = $region29
    $region28: #{tpu_custom_call.1} parent=1 // pred_region
      %77 = dma.done [#allocation8], 128
    $region29: #{tpu_custom_call.1} parent=1 // pred_fallthru
      _
    // Predicated region
    $region30: #{tpu_custom_call.1} parent=1 // pred_check
      _
    $region31: #{tpu_custom_call.1} parent=1 // pred_check_branch
      %79 = sbr.rel (0) target = $region33
    $region32: #{tpu_custom_call.1} parent=1 // pred_region
      %80 = dma.done [#allocation8], 128
    $region33: #{tpu_custom_call.1} parent=1 // pred_fallthru
      _
    // Predicated region
    $region34: #{tpu_custom_call.1} parent=1 // pred_check
      _
    $region35: #{tpu_custom_call.1} parent=1 // pred_check_branch
      %82 = sbr.rel (0) target = $region37
    $region36: #{tpu_custom_call.1} parent=1 // pred_region
      %83 = dma.done [#allocation11], 16384
    $region37: #{tpu_custom_call.1} parent=1 // pred_fallthru
      _
    // Predicated region
    $region38: #{tpu_custom_call.1} parent=1 // pred_check
      _
    $region39: #{tpu_custom_call.1} parent=1 // pred_check_branch
      %85 = sbr.rel (0) target = $region41
    $region40: #{tpu_custom_call.1} parent=1 // pred_region
      %86 = dma.done [#allocation11], 16384
    $region41: #{tpu_custom_call.1} parent=1 // pred_fallthru
      _
    %p87 = scmp.eq.s32.totalorder 0, 0
    // Predicated region
    $region42: #{tpu_custom_call.1} parent=1 // pred_check
      %p88 = pneg %p87
    $region43: #{tpu_custom_call.1} parent=1 // pred_check_branch
      %90 = sbr.rel (%p88) target = $region45
    $region44: #{tpu_custom_call.1} parent=1 // pred_region
      %vm91 = vcmask 7168
      %92 = vst.msk [vmem:[#allocation2] sm:$0xff] %vm91, 0.0
      %93 = vst [vmem:[#allocation3] sm:$0xff] 0.0
    $region45: #{tpu_custom_call.1} parent=1 // pred_fallthru
      _
    %v94 = vld [vmem:[#allocation4] sm:$0xff]
    %v96 = vcombine.high %v94, %v94
    %v98 = vunpack.c.l.s4 1966171168
    %v99 = vunpack.c.0.s8 %v98
    %v100 = vlaneseq
    %v101 = vshrl.u32 %v100, 7
    %v102 = vsub.s32 %v99, %v101
    %v103 = vrot.slane %v94, %v102
    %v105 = vunpack.c.l.s4 1966171168
    %v106 = vunpack.c.0.s8 %v105
    %v107 = vlaneseq
    %v108 = vshrl.u32 %v107, 7
    %v109 = vsub.s32 %v106, %v108
    %v110 = vrot.slane %v96, %v109
    %v111 = vcombine.high %v103, %v103
    %v112 = vcombine.high %v110, %v110
    %v114 = vunpack.c.l.s4 1966171168
    %v115 = vunpack.c.0.s8 %v114
    %v116 = vlaneseq
    %v117 = vshrl.u32 %v116, 7
    %v118 = vsub.s32 %v115, %v117
    %v119 = vrot.slane %v103, %v118
    %v121 = vunpack.c.l.s4 1966171168
    %v122 = vunpack.c.0.s8 %v121
    %v123 = vlaneseq
    %v124 = vshrl.u32 %v123, 7
    %v125 = vsub.s32 %v122, %v124
    %v126 = vrot.slane %v110, %v125
    %v128 = vunpack.c.l.s4 1966171168
    %v129 = vunpack.c.0.s8 %v128
    %v130 = vlaneseq
    %v131 = vshrl.u32 %v130, 7
    %v132 = vsub.s32 %v129, %v131
    %v133 = vrot.slane %v111, %v132
    %v135 = vunpack.c.l.s4 1966171168
    %v136 = vunpack.c.0.s8 %v135
    %v137 = vlaneseq
    %v138 = vshrl.u32 %v137, 7
    %v139 = vsub.s32 %v136, %v138
    %v140 = vrot.slane %v112, %v139
    %v141 = vcombine.high %v119, %v119
    %v142 = vcombine.high %v126, %v126
    %v143 = vcombine.high %v133, %v133
    %v144 = vcombine.high %v140, %v140
    %v153 = vld [vmem:[#allocation10] sm:$0xff]
    %v154 = vld [vmem:[#allocation10 + $0x8] sm:$0xff]
    %v155 = vld [vmem:[#allocation10 + $0x10] sm:$0xff]
    %v156 = vld [vmem:[#allocation10 + $0x18] sm:$0xff]
    %v157 = vld [vmem:[#allocation10 + $0x20] sm:$0xff]
    %v158 = vld [vmem:[#allocation10 + $0x28] sm:$0xff]
    %v159 = vld [vmem:[#allocation10 + $0x30] sm:$0xff]
    %v160 = vld [vmem:[#allocation10 + $0x38] sm:$0xff]
    %v161 = vld [vmem:[#allocation10 + $0x40] sm:$0xff]
    %v162 = vld [vmem:[#allocation10 + $0x48] sm:$0xff]
    %v163 = vld [vmem:[#allocation10 + $0x50] sm:$0xff]
    %v164 = vld [vmem:[#allocation10 + $0x58] sm:$0xff]
    %v165 = vld [vmem:[#allocation10 + $0x60] sm:$0xff]
    %v166 = vld [vmem:[#allocation10 + $0x68] sm:$0xff]
    %v167 = vld [vmem:[#allocation10 + $0x70] sm:$0xff]
    %v168 = vld [vmem:[#allocation10 + $0x78] sm:$0xff]
    %v169 = vld [vmem:[#allocation10 + $0x80] sm:$0xff]
    %v170 = vld [vmem:[#allocation10 + $0x88] sm:$0xff]
    %v171 = vld [vmem:[#allocation10 + $0x90] sm:$0xff]
    %v172 = vld [vmem:[#allocation10 + $0x98] sm:$0xff]
    %v173 = vld [vmem:[#allocation10 + $0xa0] sm:$0xff]
    %v174 = vld [vmem:[#allocation10 + $0xa8] sm:$0xff]
    %v175 = vld [vmem:[#allocation10 + $0xb0] sm:$0xff]
    %v176 = vld [vmem:[#allocation10 + $0xb8] sm:$0xff]
    %v177 = vld [vmem:[#allocation10 + $0xc0] sm:$0xff]
    %v178 = vld [vmem:[#allocation10 + $0xc8] sm:$0xff]
    %v179 = vld [vmem:[#allocation10 + $0xd0] sm:$0xff]
    %v180 = vld [vmem:[#allocation10 + $0xd8] sm:$0xff]
    %v181 = vld [vmem:[#allocation10 + $0xe0] sm:$0xff]
    %v182 = vld [vmem:[#allocation10 + $0xe8] sm:$0xff]
    %v183 = vld [vmem:[#allocation10 + $0xf0] sm:$0xff]
    %v184 = vld [vmem:[#allocation10 + $0xf8] sm:$0xff]
    %v185 = vld [vmem:[#allocation10 + $0x100] sm:$0xff]
    %v186 = vld [vmem:[#allocation10 + $0x108] sm:$0xff]
    %v187 = vld [vmem:[#allocation10 + $0x110] sm:$0xff]
    %v188 = vld [vmem:[#allocation10 + $0x118] sm:$0xff]
    %v189 = vld [vmem:[#allocation10 + $0x120] sm:$0xff]
    %v190 = vld [vmem:[#allocation10 + $0x128] sm:$0xff]
    %v191 = vld [vmem:[#allocation10 + $0x130] sm:$0xff]
    %v192 = vld [vmem:[#allocation10 + $0x138] sm:$0xff]
    %v193 = vld [vmem:[#allocation10 + $0x140] sm:$0xff]
    %v194 = vld [vmem:[#allocation10 + $0x148] sm:$0xff]
    %v195 = vld [vmem:[#allocation10 + $0x150] sm:$0xff]
    %v196 = vld [vmem:[#allocation10 + $0x158] sm:$0xff]
    %v197 = vld [vmem:[#allocation10 + $0x160] sm:$0xff]
    %v198 = vld [vmem:[#allocation10 + $0x168] sm:$0xff]
    %v199 = vld [vmem:[#allocation10 + $0x170] sm:$0xff]
    %v200 = vld [vmem:[#allocation10 + $0x178] sm:$0xff]
    %v201 = vld [vmem:[#allocation10 + $0x180] sm:$0xff]
    %v202 = vld [vmem:[#allocation10 + $0x188] sm:$0xff]
    %v203 = vld [vmem:[#allocation10 + $0x190] sm:$0xff]
    %v204 = vld [vmem:[#allocation10 + $0x198] sm:$0xff]
    %v205 = vld [vmem:[#allocation10 + $0x1a0] sm:$0xff]
    %v206 = vld [vmem:[#allocation10 + $0x1a8] sm:$0xff]
    %v207 = vld [vmem:[#allocation10 + $0x1b0] sm:$0xff]
    %v208 = vld [vmem:[#allocation10 + $0x1b8] sm:$0xff]
    %v209 = vld [vmem:[#allocation10 + $0x1c0] sm:$0xff]
    %v210 = vld [vmem:[#allocation10 + $0x1c8] sm:$0xff]
    %v211 = vld [vmem:[#allocation10 + $0x1d0] sm:$0xff]
    %v212 = vld [vmem:[#allocation10 + $0x1d8] sm:$0xff]
    %v213 = vld [vmem:[#allocation10 + $0x1e0] sm:$0xff]
    %v214 = vld [vmem:[#allocation10 + $0x1e8] sm:$0xff]
    %v215 = vld [vmem:[#allocation10 + $0x1f0] sm:$0xff]
    %v216 = vld [vmem:[#allocation10 + $0x1f8] sm:$0xff]
    %v217 = vld [vmem:[#allocation10 + $0x200] sm:$0xff]
    %v218 = vld [vmem:[#allocation10 + $0x208] sm:$0xff]
    %v219 = vld [vmem:[#allocation10 + $0x210] sm:$0xff]
    %v220 = vld [vmem:[#allocation10 + $0x218] sm:$0xff]
    %v221 = vld [vmem:[#allocation10 + $0x220] sm:$0xff]
    %v222 = vld [vmem:[#allocation10 + $0x228] sm:$0xff]
    %v223 = vld [vmem:[#allocation10 + $0x230] sm:$0xff]
    %v224 = vld [vmem:[#allocation10 + $0x238] sm:$0xff]
    %v225 = vld [vmem:[#allocation10 + $0x240] sm:$0xff]
    %v226 = vld [vmem:[#allocation10 + $0x248] sm:$0xff]
    %v227 = vld [vmem:[#allocation10 + $0x250] sm:$0xff]
    %v228 = vld [vmem:[#allocation10 + $0x258] sm:$0xff]
    %v229 = vld [vmem:[#allocation10 + $0x260] sm:$0xff]
    %v230 = vld [vmem:[#allocation10 + $0x268] sm:$0xff]
    %v231 = vld [vmem:[#allocation10 + $0x270] sm:$0xff]
    %v232 = vld [vmem:[#allocation10 + $0x278] sm:$0xff]
    %v233 = vld [vmem:[#allocation10 + $0x280] sm:$0xff]
    %v234 = vld [vmem:[#allocation10 + $0x288] sm:$0xff]
    %v235 = vld [vmem:[#allocation10 + $0x290] sm:$0xff]
    %v236 = vld [vmem:[#allocation10 + $0x298] sm:$0xff]
    %v237 = vld [vmem:[#allocation10 + $0x2a0] sm:$0xff]
    %v238 = vld [vmem:[#allocation10 + $0x2a8] sm:$0xff]
    %v239 = vld [vmem:[#allocation10 + $0x2b0] sm:$0xff]
    %v240 = vld [vmem:[#allocation10 + $0x2b8] sm:$0xff]
    %v241 = vld [vmem:[#allocation10 + $0x2c0] sm:$0xff]
    %v242 = vld [vmem:[#allocation10 + $0x2c8] sm:$0xff]
    %v243 = vld [vmem:[#allocation10 + $0x2d0] sm:$0xff]
    %v244 = vld [vmem:[#allocation10 + $0x2d8] sm:$0xff]
    %v245 = vld [vmem:[#allocation10 + $0x2e0] sm:$0xff]
    %v246 = vld [vmem:[#allocation10 + $0x2e8] sm:$0xff]
    %v247 = vld [vmem:[#allocation10 + $0x2f0] sm:$0xff]
    %v248 = vld [vmem:[#allocation10 + $0x2f8] sm:$0xff]
    %v249 = vld [vmem:[#allocation10 + $0x300] sm:$0xff]
    %v250 = vld [vmem:[#allocation10 + $0x308] sm:$0xff]
    %v251 = vld [vmem:[#allocation10 + $0x310] sm:$0xff]
    %v252 = vld [vmem:[#allocation10 + $0x318] sm:$0xff]
    %v253 = vld [vmem:[#allocation10 + $0x320] sm:$0xff]
    %v254 = vld [vmem:[#allocation10 + $0x328] sm:$0xff]
    %v255 = vld [vmem:[#allocation10 + $0x330] sm:$0xff]
    %v256 = vld [vmem:[#allocation10 + $0x338] sm:$0xff]
    %v257 = vld [vmem:[#allocation10 + $0x340] sm:$0xff]
    %v258 = vld [vmem:[#allocation10 + $0x348] sm:$0xff]
    %v259 = vld [vmem:[#allocation10 + $0x350] sm:$0xff]
    %v260 = vld [vmem:[#allocation10 + $0x358] sm:$0xff]
    %v261 = vld [vmem:[#allocation10 + $0x360] sm:$0xff]
    %v262 = vld [vmem:[#allocation10 + $0x368] sm:$0xff]
    %v263 = vld [vmem:[#allocation10 + $0x370] sm:$0xff]
    %v264 = vld [vmem:[#allocation10 + $0x378] sm:$0xff]
    %v265 = vld [vmem:[#allocation10 + $0x380] sm:$0xff]
    %v266 = vld [vmem:[#allocation10 + $0x388] sm:$0xff]
    %v267 = vld [vmem:[#allocation10 + $0x390] sm:$0xff]
    %v268 = vld [vmem:[#allocation10 + $0x398] sm:$0xff]
    %v269 = vld [vmem:[#allocation10 + $0x3a0] sm:$0xff]
    %v270 = vld [vmem:[#allocation10 + $0x3a8] sm:$0xff]
    %v271 = vld [vmem:[#allocation10 + $0x3b0] sm:$0xff]
    %v272 = vld [vmem:[#allocation10 + $0x3b8] sm:$0xff]
    %v273 = vld [vmem:[#allocation10 + $0x3c0] sm:$0xff]
    %v274 = vld [vmem:[#allocation10 + $0x3c8] sm:$0xff]
    %v275 = vld [vmem:[#allocation10 + $0x3d0] sm:$0xff]
    %v276 = vld [vmem:[#allocation10 + $0x3d8] sm:$0xff]
    %v277 = vld [vmem:[#allocation10 + $0x3e0] sm:$0xff]
    %v278 = vld [vmem:[#allocation10 + $0x3e8] sm:$0xff]
    %v279 = vld [vmem:[#allocation10 + $0x3f0] sm:$0xff]
    %v280 = vld [vmem:[#allocation10 + $0x3f8] sm:$0xff]
    %281 = vmatprep.subr.mxu0 0.0
    %282 = vmatpush1.xpose.msra.mxu0 %v168
    %283 = vmatprep.subr.mxu0 0.0
    %284 = vmatpush1.xpose.msra.mxu0 %v167
    %285 = vmatprep.subr.mxu0 0.0
    %286 = vmatpush1.xpose.msra.mxu0 %v166
    %287 = vmatprep.subr.mxu0 0.0
    %288 = vmatpush1.xpose.msra.mxu0 %v165
    %289 = vmatprep.subr.mxu0 0.0
    %290 = vmatpush1.xpose.msra.mxu0 %v164
    %291 = vmatprep.subr.mxu0 0.0
    %292 = vmatpush1.xpose.msra.mxu0 %v163
    %293 = vmatprep.subr.mxu0 0.0
    %294 = vmatpush1.xpose.msra.mxu0 %v162
    %295 = vmatprep.subr.mxu0 0.0
    %296 = vmatpush1.xpose.msra.mxu0 %v161
    %297 = vmatprep.subr.mxu0 0.0
    %298 = vmatpush1.xpose.msra.mxu0 %v160
    %299 = vmatprep.subr.mxu0 0.0
    %300 = vmatpush1.xpose.msra.mxu0 %v159
    %301 = vmatprep.subr.mxu0 0.0
    %302 = vmatpush1.xpose.msra.mxu0 %v158
    %303 = vmatprep.subr.mxu0 0.0
    %304 = vmatpush1.xpose.msra.mxu0 %v157
    %305 = vmatprep.subr.mxu0 0.0
    %306 = vmatpush1.xpose.msra.mxu0 %v156
    %307 = vmatprep.subr.mxu0 0.0
    %308 = vmatpush1.xpose.msra.mxu0 %v155
    %309 = vmatprep.subr.mxu0 0.0
    %310 = vmatpush1.xpose.msra.mxu0 %v154
    %311 = vmatprep.subr.mxu0 0.0
    %312 = vmatpush1.xpose.msra.mxu0 %v153
    %313 = vmatprep.subr.mxu0 0.0
    %314 = vmatpush2.xpose.msra.mxu0 0.0
    %315 = vmatprep.subr.mxu0 0.0
    %316 = vmatpush2.xpose.msra.mxu0 0.0
    %317 = vmatprep.subr.mxu0 0.0
    %318 = vmatpush2.xpose.msra.mxu0 0.0
    %319 = vmatprep.subr.mxu0 0.0
    %320 = vmatpush2.xpose.msra.mxu0 0.0
    %321 = vmatprep.subr.mxu0 0.0
    %322 = vmatpush2.xpose.msra.mxu0 0.0
    %323 = vmatprep.subr.mxu0 0.0
    %324 = vmatpush2.xpose.msra.mxu0 0.0
    %325 = vmatprep.subr.mxu0 0.0
    %326 = vmatpush2.xpose.msra.mxu0 0.0
    %327 = vmatprep.subr.mxu0 0.0
    %328 = vmatpush2.xpose.msra.mxu0 0.0
    %329 = vmatprep.subr.mxu0 0.0
    %330 = vmatpush2.xpose.msra.mxu0 0.0
    %331 = vmatprep.subr.mxu0 0.0
    %332 = vmatpush2.xpose.msra.mxu0 0.0
    %333 = vmatprep.subr.mxu0 0.0
    %334 = vmatpush2.xpose.msra.mxu0 0.0
    %335 = vmatprep.subr.mxu0 0.0
    %336 = vmatpush2.xpose.msra.mxu0 0.0
    %337 = vmatprep.subr.mxu0 0.0
    %338 = vmatpush2.xpose.msra.mxu0 0.0
    %339 = vmatprep.subr.mxu0 0.0
    %340 = vmatpush2.xpose.msra.mxu0 0.0
    %341 = vmatprep.subr.mxu0 0.0
    %342 = vmatpush2.xpose.msra.mxu0 0.0
    %343 = vmatprep.subr.mxu0 0.0
    %344 = vmatpush2.xpose.msra.mxu0 0.0
    %345 = vmatprep.mubr.f32.mxu0 0.0
    %346 = vmatmul.mubr.f32.gmra.mxu0 %v119
    %v347 = vpop.f32.mrf.mxu0
    %v348 = vadd.f32 0.0, %v347
    %v349 = vpop.f32.mrf.mxu0
    %350 = vdwg.mxu0
    %351 = vmatprep.subr.mxu0 0.0
    %352 = vmatpush1.xpose.msra.mxu0 %v184
    %353 = vmatprep.subr.mxu0 0.0
    %354 = vmatpush1.xpose.msra.mxu0 %v183
    %355 = vmatprep.subr.mxu0 0.0
    %356 = vmatpush1.xpose.msra.mxu0 %v182
    %357 = vmatprep.subr.mxu0 0.0
    %358 = vmatpush1.xpose.msra.mxu0 %v181
    %359 = vmatprep.subr.mxu0 0.0
    %360 = vmatpush1.xpose.msra.mxu0 %v180
    %361 = vmatprep.subr.mxu0 0.0
    %362 = vmatpush1.xpose.msra.mxu0 %v179
    %363 = vmatprep.subr.mxu0 0.0
    %364 = vmatpush1.xpose.msra.mxu0 %v178
    %365 = vmatprep.subr.mxu0 0.0
    %366 = vmatpush1.xpose.msra.mxu0 %v177
    %367 = vmatprep.subr.mxu0 0.0
    %368 = vmatpush1.xpose.msra.mxu0 %v176
    %369 = vmatprep.subr.mxu0 0.0
    %370 = vmatpush1.xpose.msra.mxu0 %v175
    %371 = vmatprep.subr.mxu0 0.0
    %372 = vmatpush1.xpose.msra.mxu0 %v174
    %373 = vmatprep.subr.mxu0 0.0
    %374 = vmatpush1.xpose.msra.mxu0 %v173
    %375 = vmatprep.subr.mxu0 0.0
    %376 = vmatpush1.xpose.msra.mxu0 %v172
    %377 = vmatprep.subr.mxu0 0.0
    %378 = vmatpush1.xpose.msra.mxu0 %v171
    %379 = vmatprep.subr.mxu0 0.0
    %380 = vmatpush1.xpose.msra.mxu0 %v170
    %381 = vmatprep.subr.mxu0 0.0
    %382 = vmatpush1.xpose.msra.mxu0 %v169
    %383 = vmatprep.subr.mxu0 0.0
    %384 = vmatpush2.xpose.msra.mxu0 0.0
    %385 = vmatprep.subr.mxu0 0.0
    %386 = vmatpush2.xpose.msra.mxu0 0.0
    %387 = vmatprep.subr.mxu0 0.0
    %388 = vmatpush2.xpose.msra.mxu0 0.0
    %389 = vmatprep.subr.mxu0 0.0
    %390 = vmatpush2.xpose.msra.mxu0 0.0
    %391 = vmatprep.subr.mxu0 0.0
    %392 = vmatpush2.xpose.msra.mxu0 0.0
    %393 = vmatprep.subr.mxu0 0.0
    %394 = vmatpush2.xpose.msra.mxu0 0.0
    %395 = vmatprep.subr.mxu0 0.0
    %396 = vmatpush2.xpose.msra.mxu0 0.0
    %397 = vmatprep.subr.mxu0 0.0
    %398 = vmatpush2.xpose.msra.mxu0 0.0
    %399 = vmatprep.subr.mxu0 0.0
    %400 = vmatpush2.xpose.msra.mxu0 0.0
    %401 = vmatprep.subr.mxu0 0.0
    %402 = vmatpush2.xpose.msra.mxu0 0.0
    %403 = vmatprep.subr.mxu0 0.0
    %404 = vmatpush2.xpose.msra.mxu0 0.0
    %405 = vmatprep.subr.mxu0 0.0
    %406 = vmatpush2.xpose.msra.mxu0 0.0
    %407 = vmatprep.subr.mxu0 0.0
    %408 = vmatpush2.xpose.msra.mxu0 0.0
    %409 = vmatprep.subr.mxu0 0.0
    %410 = vmatpush2.xpose.msra.mxu0 0.0
    %411 = vmatprep.subr.mxu0 0.0
    %412 = vmatpush2.xpose.msra.mxu0 0.0
    %413 = vmatprep.subr.mxu0 0.0
    %414 = vmatpush2.xpose.msra.mxu0 0.0
    %415 = vmatprep.mubr.f32.mxu0 0.0
    %416 = vmatmul.mubr.f32.gmra.mxu0 %v133
    %v417 = vpop.f32.mrf.mxu0
    %v418 = vadd.f32 0.0, %v417
    %v419 = vpop.f32.mrf.mxu0
    %420 = vdwg.mxu0
    %421 = vmatprep.subr.mxu0 0.0
    %422 = vmatpush1.xpose.msra.mxu0 %v200
    %423 = vmatprep.subr.mxu0 0.0
    %424 = vmatpush1.xpose.msra.mxu0 %v199
    %425 = vmatprep.subr.mxu0 0.0
    %426 = vmatpush1.xpose.msra.mxu0 %v198
    %427 = vmatprep.subr.mxu0 0.0
    %428 = vmatpush1.xpose.msra.mxu0 %v197
    %429 = vmatprep.subr.mxu0 0.0
    %430 = vmatpush1.xpose.msra.mxu0 %v196
    %431 = vmatprep.subr.mxu0 0.0
    %432 = vmatpush1.xpose.msra.mxu0 %v195
    %433 = vmatprep.subr.mxu0 0.0
    %434 = vmatpush1.xpose.msra.mxu0 %v194
    %435 = vmatprep.subr.mxu0 0.0
    %436 = vmatpush1.xpose.msra.mxu0 %v193
    %437 = vmatprep.subr.mxu0 0.0
    %438 = vmatpush1.xpose.msra.mxu0 %v192
    %439 = vmatprep.subr.mxu0 0.0
    %440 = vmatpush1.xpose.msra.mxu0 %v191
    %441 = vmatprep.subr.mxu0 0.0
    %442 = vmatpush1.xpose.msra.mxu0 %v190
    %443 = vmatprep.subr.mxu0 0.0
    %444 = vmatpush1.xpose.msra.mxu0 %v189
    %445 = vmatprep.subr.mxu0 0.0
    %446 = vmatpush1.xpose.msra.mxu0 %v188
    %447 = vmatprep.subr.mxu0 0.0
    %448 = vmatpush1.xpose.msra.mxu0 %v187
    %449 = vmatprep.subr.mxu0 0.0
    %450 = vmatpush1.xpose.msra.mxu0 %v186
    %451 = vmatprep.subr.mxu0 0.0
    %452 = vmatpush1.xpose.msra.mxu0 %v185
    %453 = vmatprep.subr.mxu0 0.0
    %454 = vmatpush2.xpose.msra.mxu0 0.0
    %455 = vmatprep.subr.mxu0 0.0
    %456 = vmatpush2.xpose.msra.mxu0 0.0
    %457 = vmatprep.subr.mxu0 0.0
    %458 = vmatpush2.xpose.msra.mxu0 0.0
    %459 = vmatprep.subr.mxu0 0.0
    %460 = vmatpush2.xpose.msra.mxu0 0.0
    %461 = vmatprep.subr.mxu0 0.0
    %462 = vmatpush2.xpose.msra.mxu0 0.0
    %463 = vmatprep.subr.mxu0 0.0
    %464 = vmatpush2.xpose.msra.mxu0 0.0
    %465 = vmatprep.subr.mxu0 0.0
    %466 = vmatpush2.xpose.msra.mxu0 0.0
    %467 = vmatprep.subr.mxu0 0.0
    %468 = vmatpush2.xpose.msra.mxu0 0.0
    %469 = vmatprep.subr.mxu0 0.0
    %470 = vmatpush2.xpose.msra.mxu0 0.0
    %471 = vmatprep.subr.mxu0 0.0
    %472 = vmatpush2.xpose.msra.mxu0 0.0
    %473 = vmatprep.subr.mxu0 0.0
    %474 = vmatpush2.xpose.msra.mxu0 0.0
    %475 = vmatprep.subr.mxu0 0.0
    %476 = vmatpush2.xpose.msra.mxu0 0.0
    %477 = vmatprep.subr.mxu0 0.0
    %478 = vmatpush2.xpose.msra.mxu0 0.0
    %479 = vmatprep.subr.mxu0 0.0
    %480 = vmatpush2.xpose.msra.mxu0 0.0
    %481 = vmatprep.subr.mxu0 0.0
    %482 = vmatpush2.xpose.msra.mxu0 0.0
    %483 = vmatprep.subr.mxu0 0.0
    %484 = vmatpush2.xpose.msra.mxu0 0.0
    %485 = vmatprep.mubr.f32.mxu0 0.0
    %486 = vmatmul.mubr.f32.gmra.mxu0 %v141
    %v487 = vpop.f32.mrf.mxu0
    %v488 = vadd.f32 0.0, %v487
    %v489 = vpop.f32.mrf.mxu0
    %490 = vdwg.mxu0
    %491 = vmatprep.subr.mxu0 0.0
    %492 = vmatpush1.xpose.msra.mxu0 %v216
    %493 = vmatprep.subr.mxu0 0.0
    %494 = vmatpush1.xpose.msra.mxu0 %v215
    %495 = vmatprep.subr.mxu0 0.0
    %496 = vmatpush1.xpose.msra.mxu0 %v214
    %497 = vmatprep.subr.mxu0 0.0
    %498 = vmatpush1.xpose.msra.mxu0 %v213
    %499 = vmatprep.subr.mxu0 0.0
    %500 = vmatpush1.xpose.msra.mxu0 %v212
    %501 = vmatprep.subr.mxu0 0.0
    %502 = vmatpush1.xpose.msra.mxu0 %v211
    %503 = vmatprep.subr.mxu0 0.0
    %504 = vmatpush1.xpose.msra.mxu0 %v210
    %505 = vmatprep.subr.mxu0 0.0
    %506 = vmatpush1.xpose.msra.mxu0 %v209
    %507 = vmatprep.subr.mxu0 0.0
    %508 = vmatpush1.xpose.msra.mxu0 %v208
    %509 = vmatprep.subr.mxu0 0.0
    %510 = vmatpush1.xpose.msra.mxu0 %v207
    %511 = vmatprep.subr.mxu0 0.0
    %512 = vmatpush1.xpose.msra.mxu0 %v206
    %513 = vmatprep.subr.mxu0 0.0
    %514 = vmatpush1.xpose.msra.mxu0 %v205
    %515 = vmatprep.subr.mxu0 0.0
    %516 = vmatpush1.xpose.msra.mxu0 %v204
    %517 = vmatprep.subr.mxu0 0.0
    %518 = vmatpush1.xpose.msra.mxu0 %v203
    %519 = vmatprep.subr.mxu0 0.0
    %520 = vmatpush1.xpose.msra.mxu0 %v202
    %521 = vmatprep.subr.mxu0 0.0
    %522 = vmatpush1.xpose.msra.mxu0 %v201
    %523 = vmatprep.subr.mxu0 0.0
    %524 = vmatpush2.xpose.msra.mxu0 0.0
    %525 = vmatprep.subr.mxu0 0.0
    %526 = vmatpush2.xpose.msra.mxu0 0.0
    %527 = vmatprep.subr.mxu0 0.0
    %528 = vmatpush2.xpose.msra.mxu0 0.0
    %529 = vmatprep.subr.mxu0 0.0
    %530 = vmatpush2.xpose.msra.mxu0 0.0
    %531 = vmatprep.subr.mxu0 0.0
    %532 = vmatpush2.xpose.msra.mxu0 0.0
    %533 = vmatprep.subr.mxu0 0.0
    %534 = vmatpush2.xpose.msra.mxu0 0.0
    %535 = vmatprep.subr.mxu0 0.0
    %536 = vmatpush2.xpose.msra.mxu0 0.0
    %537 = vmatprep.subr.mxu0 0.0
    %538 = vmatpush2.xpose.msra.mxu0 0.0
    %539 = vmatprep.subr.mxu0 0.0
    %540 = vmatpush2.xpose.msra.mxu0 0.0
    %541 = vmatprep.subr.mxu0 0.0
    %542 = vmatpush2.xpose.msra.mxu0 0.0
    %543 = vmatprep.subr.mxu0 0.0
    %544 = vmatpush2.xpose.msra.mxu0 0.0
    %545 = vmatprep.subr.mxu0 0.0
    %546 = vmatpush2.xpose.msra.mxu0 0.0
    %547 = vmatprep.subr.mxu0 0.0
    %548 = vmatpush2.xpose.msra.mxu0 0.0
    %549 = vmatprep.subr.mxu0 0.0
    %550 = vmatpush2.xpose.msra.mxu0 0.0
    %551 = vmatprep.subr.mxu0 0.0
    %552 = vmatpush2.xpose.msra.mxu0 0.0
    %553 = vmatprep.subr.mxu0 0.0
    %554 = vmatpush2.xpose.msra.mxu0 0.0
    %555 = vmatprep.mubr.f32.mxu0 0.0
    %556 = vmatmul.mubr.f32.gmra.mxu0 %v143
    %v557 = vpop.f32.mrf.mxu0
    %v558 = vadd.f32 0.0, %v557
    %v559 = vpop.f32.mrf.mxu0
    %560 = vdwg.mxu0
    %561 = vmatprep.subr.mxu0 0.0
    %562 = vmatpush1.xpose.msra.mxu0 %v232
    %563 = vmatprep.subr.mxu0 0.0
    %564 = vmatpush1.xpose.msra.mxu0 %v231
    %565 = vmatprep.subr.mxu0 0.0
    %566 = vmatpush1.xpose.msra.mxu0 %v230
    %567 = vmatprep.subr.mxu0 0.0
    %568 = vmatpush1.xpose.msra.mxu0 %v229
    %569 = vmatprep.subr.mxu0 0.0
    %570 = vmatpush1.xpose.msra.mxu0 %v228
    %571 = vmatprep.subr.mxu0 0.0
    %572 = vmatpush1.xpose.msra.mxu0 %v227
    %573 = vmatprep.subr.mxu0 0.0
    %574 = vmatpush1.xpose.msra.mxu0 %v226
    %575 = vmatprep.subr.mxu0 0.0
    %576 = vmatpush1.xpose.msra.mxu0 %v225
    %577 = vmatprep.subr.mxu0 0.0
    %578 = vmatpush1.xpose.msra.mxu0 %v224
    %579 = vmatprep.subr.mxu0 0.0
    %580 = vmatpush1.xpose.msra.mxu0 %v223
    %581 = vmatprep.subr.mxu0 0.0
    %582 = vmatpush1.xpose.msra.mxu0 %v222
    %583 = vmatprep.subr.mxu0 0.0
    %584 = vmatpush1.xpose.msra.mxu0 %v221
    %585 = vmatprep.subr.mxu0 0.0
    %586 = vmatpush1.xpose.msra.mxu0 %v220
    %587 = vmatprep.subr.mxu0 0.0
    %588 = vmatpush1.xpose.msra.mxu0 %v219
    %589 = vmatprep.subr.mxu0 0.0
    %590 = vmatpush1.xpose.msra.mxu0 %v218
    %591 = vmatprep.subr.mxu0 0.0
    %592 = vmatpush1.xpose.msra.mxu0 %v217
    %593 = vmatprep.subr.mxu0 0.0
    %594 = vmatpush2.xpose.msra.mxu0 0.0
    %595 = vmatprep.subr.mxu0 0.0
    %596 = vmatpush2.xpose.msra.mxu0 0.0
    %597 = vmatprep.subr.mxu0 0.0
    %598 = vmatpush2.xpose.msra.mxu0 0.0
    %599 = vmatprep.subr.mxu0 0.0
    %600 = vmatpush2.xpose.msra.mxu0 0.0
    %601 = vmatprep.subr.mxu0 0.0
    %602 = vmatpush2.xpose.msra.mxu0 0.0
    %603 = vmatprep.subr.mxu0 0.0
    %604 = vmatpush2.xpose.msra.mxu0 0.0
    %605 = vmatprep.subr.mxu0 0.0
    %606 = vmatpush2.xpose.msra.mxu0 0.0
    %607 = vmatprep.subr.mxu0 0.0
    %608 = vmatpush2.xpose.msra.mxu0 0.0
    %609 = vmatprep.subr.mxu0 0.0
    %610 = vmatpush2.xpose.msra.mxu0 0.0
    %611 = vmatprep.subr.mxu0 0.0
    %612 = vmatpush2.xpose.msra.mxu0 0.0
    %613 = vmatprep.subr.mxu0 0.0
    %614 = vmatpush2.xpose.msra.mxu0 0.0
    %615 = vmatprep.subr.mxu0 0.0
    %616 = vmatpush2.xpose.msra.mxu0 0.0
    %617 = vmatprep.subr.mxu0 0.0
    %618 = vmatpush2.xpose.msra.mxu0 0.0
    %619 = vmatprep.subr.mxu0 0.0
    %620 = vmatpush2.xpose.msra.mxu0 0.0
    %621 = vmatprep.subr.mxu0 0.0
    %622 = vmatpush2.xpose.msra.mxu0 0.0
    %623 = vmatprep.subr.mxu0 0.0
    %624 = vmatpush2.xpose.msra.mxu0 0.0
    %625 = vmatprep.mubr.f32.mxu0 0.0
    %626 = vmatmul.mubr.f32.gmra.mxu0 %v126
    %v627 = vpop.f32.mrf.mxu0
    %v628 = vadd.f32 0.0, %v627
    %v629 = vpop.f32.mrf.mxu0
    %630 = vdwg.mxu0
    %631 = vmatprep.subr.mxu0 0.0
    %632 = vmatpush1.xpose.msra.mxu0 %v248
    %633 = vmatprep.subr.mxu0 0.0
    %634 = vmatpush1.xpose.msra.mxu0 %v247
    %635 = vmatprep.subr.mxu0 0.0
    %636 = vmatpush1.xpose.msra.mxu0 %v246
    %637 = vmatprep.subr.mxu0 0.0
    %638 = vmatpush1.xpose.msra.mxu0 %v245
    %639 = vmatprep.subr.mxu0 0.0
    %640 = vmatpush1.xpose.msra.mxu0 %v244
    %641 = vmatprep.subr.mxu0 0.0
    %642 = vmatpush1.xpose.msra.mxu0 %v243
    %643 = vmatprep.subr.mxu0 0.0
    %644 = vmatpush1.xpose.msra.mxu0 %v242
    %645 = vmatprep.subr.mxu0 0.0
    %646 = vmatpush1.xpose.msra.mxu0 %v241
    %647 = vmatprep.subr.mxu0 0.0
    %648 = vmatpush1.xpose.msra.mxu0 %v240
    %649 = vmatprep.subr.mxu0 0.0
    %650 = vmatpush1.xpose.msra.mxu0 %v239
    %651 = vmatprep.subr.mxu0 0.0
    %652 = vmatpush1.xpose.msra.mxu0 %v238
    %653 = vmatprep.subr.mxu0 0.0
    %654 = vmatpush1.xpose.msra.mxu0 %v237
    %655 = vmatprep.subr.mxu0 0.0
    %656 = vmatpush1.xpose.msra.mxu0 %v236
    %657 = vmatprep.subr.mxu0 0.0
    %658 = vmatpush1.xpose.msra.mxu0 %v235
    %659 = vmatprep.subr.mxu0 0.0
    %660 = vmatpush1.xpose.msra.mxu0 %v234
    %661 = vmatprep.subr.mxu0 0.0
    %662 = vmatpush1.xpose.msra.mxu0 %v233
    %663 = vmatprep.subr.mxu0 0.0
    %664 = vmatpush2.xpose.msra.mxu0 0.0
    %665 = vmatprep.subr.mxu0 0.0
    %666 = vmatpush2.xpose.msra.mxu0 0.0
    %667 = vmatprep.subr.mxu0 0.0
    %668 = vmatpush2.xpose.msra.mxu0 0.0
    %669 = vmatprep.subr.mxu0 0.0
    %670 = vmatpush2.xpose.msra.mxu0 0.0
    %671 = vmatprep.subr.mxu0 0.0
    %672 = vmatpush2.xpose.msra.mxu0 0.0
    %673 = vmatprep.subr.mxu0 0.0
    %674 = vmatpush2.xpose.msra.mxu0 0.0
    %675 = vmatprep.subr.mxu0 0.0
    %676 = vmatpush2.xpose.msra.mxu0 0.0
    %677 = vmatprep.subr.mxu0 0.0
    %678 = vmatpush2.xpose.msra.mxu0 0.0
    %679 = vmatprep.subr.mxu0 0.0
    %680 = vmatpush2.xpose.msra.mxu0 0.0
    %681 = vmatprep.subr.mxu0 0.0
    %682 = vmatpush2.xpose.msra.mxu0 0.0
    %683 = vmatprep.subr.mxu0 0.0
    %684 = vmatpush2.xpose.msra.mxu0 0.0
    %685 = vmatprep.subr.mxu0 0.0
    %686 = vmatpush2.xpose.msra.mxu0 0.0
    %687 = vmatprep.subr.mxu0 0.0
    %688 = vmatpush2.xpose.msra.mxu0 0.0
    %689 = vmatprep.subr.mxu0 0.0
    %690 = vmatpush2.xpose.msra.mxu0 0.0
    %691 = vmatprep.subr.mxu0 0.0
    %692 = vmatpush2.xpose.msra.mxu0 0.0
    %693 = vmatprep.subr.mxu0 0.0
    %694 = vmatpush2.xpose.msra.mxu0 0.0
    %695 = vmatprep.mubr.f32.mxu0 0.0
    %696 = vmatmul.mubr.f32.gmra.mxu0 %v140
    %v697 = vpop.f32.mrf.mxu0
    %v698 = vadd.f32 0.0, %v697
    %v699 = vpop.f32.mrf.mxu0
    %700 = vdwg.mxu0
    %701 = vmatprep.subr.mxu0 0.0
    %702 = vmatpush1.xpose.msra.mxu0 %v264
    %703 = vmatprep.subr.mxu0 0.0
    %704 = vmatpush1.xpose.msra.mxu0 %v263
    %705 = vmatprep.subr.mxu0 0.0
    %706 = vmatpush1.xpose.msra.mxu0 %v262
    %707 = vmatprep.subr.mxu0 0.0
    %708 = vmatpush1.xpose.msra.mxu0 %v261
    %709 = vmatprep.subr.mxu0 0.0
    %710 = vmatpush1.xpose.msra.mxu0 %v260
    %711 = vmatprep.subr.mxu0 0.0
    %712 = vmatpush1.xpose.msra.mxu0 %v259
    %713 = vmatprep.subr.mxu0 0.0
    %714 = vmatpush1.xpose.msra.mxu0 %v258
    %715 = vmatprep.subr.mxu0 0.0
    %716 = vmatpush1.xpose.msra.mxu0 %v257
    %717 = vmatprep.subr.mxu0 0.0
    %718 = vmatpush1.xpose.msra.mxu0 %v256
    %719 = vmatprep.subr.mxu0 0.0
    %720 = vmatpush1.xpose.msra.mxu0 %v255
    %721 = vmatprep.subr.mxu0 0.0
    %722 = vmatpush1.xpose.msra.mxu0 %v254
    %723 = vmatprep.subr.mxu0 0.0
    %724 = vmatpush1.xpose.msra.mxu0 %v253
    %725 = vmatprep.subr.mxu0 0.0
    %726 = vmatpush1.xpose.msra.mxu0 %v252
    %727 = vmatprep.subr.mxu0 0.0
    %728 = vmatpush1.xpose.msra.mxu0 %v251
    %729 = vmatprep.subr.mxu0 0.0
    %730 = vmatpush1.xpose.msra.mxu0 %v250
    %731 = vmatprep.subr.mxu0 0.0
    %732 = vmatpush1.xpose.msra.mxu0 %v249
    %733 = vmatprep.subr.mxu0 0.0
    %734 = vmatpush2.xpose.msra.mxu0 0.0
    %735 = vmatprep.subr.mxu0 0.0
    %736 = vmatpush2.xpose.msra.mxu0 0.0
    %737 = vmatprep.subr.mxu0 0.0
    %738 = vmatpush2.xpose.msra.mxu0 0.0
    %739 = vmatprep.subr.mxu0 0.0
    %740 = vmatpush2.xpose.msra.mxu0 0.0
    %741 = vmatprep.subr.mxu0 0.0
    %742 = vmatpush2.xpose.msra.mxu0 0.0
    %743 = vmatprep.subr.mxu0 0.0
    %744 = vmatpush2.xpose.msra.mxu0 0.0
    %745 = vmatprep.subr.mxu0 0.0
    %746 = vmatpush2.xpose.msra.mxu0 0.0
    %747 = vmatprep.subr.mxu0 0.0
    %748 = vmatpush2.xpose.msra.mxu0 0.0
    %749 = vmatprep.subr.mxu0 0.0
    %750 = vmatpush2.xpose.msra.mxu0 0.0
    %751 = vmatprep.subr.mxu0 0.0
    %752 = vmatpush2.xpose.msra.mxu0 0.0
    %753 = vmatprep.subr.mxu0 0.0
    %754 = vmatpush2.xpose.msra.mxu0 0.0
    %755 = vmatprep.subr.mxu0 0.0
    %756 = vmatpush2.xpose.msra.mxu0 0.0
    %757 = vmatprep.subr.mxu0 0.0
    %758 = vmatpush2.xpose.msra.mxu0 0.0
    %759 = vmatprep.subr.mxu0 0.0
    %760 = vmatpush2.xpose.msra.mxu0 0.0
    %761 = vmatprep.subr.mxu0 0.0
    %762 = vmatpush2.xpose.msra.mxu0 0.0
    %763 = vmatprep.subr.mxu0 0.0
    %764 = vmatpush2.xpose.msra.mxu0 0.0
    %765 = vmatprep.mubr.f32.mxu0 0.0
    %766 = vmatmul.mubr.f32.gmra.mxu0 %v142
    %v767 = vpop.f32.mrf.mxu0
    %v768 = vadd.f32 0.0, %v767
    %v769 = vpop.f32.mrf.mxu0
    %770 = vdwg.mxu0
    %771 = vmatprep.subr.mxu0 0.0
    %772 = vmatpush1.xpose.msra.mxu0 %v280
    %773 = vmatprep.subr.mxu0 0.0
    %774 = vmatpush1.xpose.msra.mxu0 %v279
    %775 = vmatprep.subr.mxu0 0.0
    %776 = vmatpush1.xpose.msra.mxu0 %v278
    %777 = vmatprep.subr.mxu0 0.0
    %778 = vmatpush1.xpose.msra.mxu0 %v277
    %779 = vmatprep.subr.mxu0 0.0
    %780 = vmatpush1.xpose.msra.mxu0 %v276
    %781 = vmatprep.subr.mxu0 0.0
    %782 = vmatpush1.xpose.msra.mxu0 %v275
    %783 = vmatprep.subr.mxu0 0.0
    %784 = vmatpush1.xpose.msra.mxu0 %v274
    %785 = vmatprep.subr.mxu0 0.0
    %786 = vmatpush1.xpose.msra.mxu0 %v273
    %787 = vmatprep.subr.mxu0 0.0
    %788 = vmatpush1.xpose.msra.mxu0 %v272
    %789 = vmatprep.subr.mxu0 0.0
    %790 = vmatpush1.xpose.msra.mxu0 %v271
    %791 = vmatprep.subr.mxu0 0.0
    %792 = vmatpush1.xpose.msra.mxu0 %v270
    %793 = vmatprep.subr.mxu0 0.0
    %794 = vmatpush1.xpose.msra.mxu0 %v269
    %795 = vmatprep.subr.mxu0 0.0
    %796 = vmatpush1.xpose.msra.mxu0 %v268
    %797 = vmatprep.subr.mxu0 0.0
    %798 = vmatpush1.xpose.msra.mxu0 %v267
    %799 = vmatprep.subr.mxu0 0.0
    %800 = vmatpush1.xpose.msra.mxu0 %v266
    %801 = vmatprep.subr.mxu0 0.0
    %802 = vmatpush1.xpose.msra.mxu0 %v265
    %803 = vmatprep.subr.mxu0 0.0
    %804 = vmatpush2.xpose.msra.mxu0 0.0
    %805 = vmatprep.subr.mxu0 0.0
    %806 = vmatpush2.xpose.msra.mxu0 0.0
    %807 = vmatprep.subr.mxu0 0.0
    %808 = vmatpush2.xpose.msra.mxu0 0.0
    %809 = vmatprep.subr.mxu0 0.0
    %810 = vmatpush2.xpose.msra.mxu0 0.0
    %811 = vmatprep.subr.mxu0 0.0
    %812 = vmatpush2.xpose.msra.mxu0 0.0
    %813 = vmatprep.subr.mxu0 0.0
    %814 = vmatpush2.xpose.msra.mxu0 0.0
    %815 = vmatprep.subr.mxu0 0.0
    %816 = vmatpush2.xpose.msra.mxu0 0.0
    %817 = vmatprep.subr.mxu0 0.0
    %818 = vmatpush2.xpose.msra.mxu0 0.0
    %819 = vmatprep.subr.mxu0 0.0
    %820 = vmatpush2.xpose.msra.mxu0 0.0
    %821 = vmatprep.subr.mxu0 0.0
    %822 = vmatpush2.xpose.msra.mxu0 0.0
    %823 = vmatprep.subr.mxu0 0.0
    %824 = vmatpush2.xpose.msra.mxu0 0.0
    %825 = vmatprep.subr.mxu0 0.0
    %826 = vmatpush2.xpose.msra.mxu0 0.0
    %827 = vmatprep.subr.mxu0 0.0
    %828 = vmatpush2.xpose.msra.mxu0 0.0
    %829 = vmatprep.subr.mxu0 0.0
    %830 = vmatpush2.xpose.msra.mxu0 0.0
    %831 = vmatprep.subr.mxu0 0.0
    %832 = vmatpush2.xpose.msra.mxu0 0.0
    %833 = vmatprep.subr.mxu0 0.0
    %834 = vmatpush2.xpose.msra.mxu0 0.0
    %835 = vmatprep.mubr.f32.mxu0 0.0
    %836 = vmatmul.mubr.f32.gmra.mxu0 %v144
    %v837 = vpop.f32.mrf.mxu0
    %v838 = vadd.f32 0.0, %v837
    %v839 = vpop.f32.mrf.mxu0
    %840 = vdwg.mxu0
    %v841 = vld [vmem:[#allocation7] sm:$0xff]
    %v843 = vrot.slane %v841, 1
    %v844 = vrot.slane %v841, 2
    %v845 = vrot.slane %v841, 3
    %v846 = vrot.slane %v841, 4
    %v847 = vrot.slane %v841, 5
    %v848 = vrot.slane %v841, 6
    %v849 = vrot.slane %v841, 7
    %v858 = vadd.f32 %v348, %v841
    %v859 = vadd.f32 %v418, %v843
    %v860 = vadd.f32 %v488, %v844
    %v861 = vadd.f32 %v558, %v845
    %v862 = vadd.f32 %v628, %v846
    %v863 = vadd.f32 %v698, %v847
    %v864 = vadd.f32 %v768, %v848
    %v865 = vadd.f32 %v838, %v849
    %v866 = vmul.f32 %v858, 0.17677669
    %v867 = vmul.f32 %v859, 0.17677669
    %v868 = vmul.f32 %v860, 0.17677669
    %v869 = vmul.f32 %v861, 0.17677669
    %v870 = vmul.f32 %v862, 0.17677669
    %v871 = vmul.f32 %v863, 0.17677669
    %v872 = vmul.f32 %v864, 0.17677669
    %v873 = vmul.f32 %v865, 0.17677669
    %v874 = vtanh.pop %v866
    %v875 = vtanh.pop %v867
    %v876 = vtanh.pop %v868
    %v877 = vtanh.pop %v869
    %v878 = vtanh.pop %v870
    %v879 = vtanh.pop %v871
    %v880 = vtanh.pop %v872
    %v881 = vtanh.pop %v873
    %v882 = vmul.f32 %v874, 10.0
    %v883 = vmul.f32 %v875, 10.0
    %v884 = vmul.f32 %v876, 10.0
    %v885 = vmul.f32 %v877, 10.0
    %v886 = vmul.f32 %v878, 10.0
    %v887 = vmul.f32 %v879, 10.0
    %v888 = vmul.f32 %v880, 10.0
    %v889 = vmul.f32 %v881, 10.0
    %v890 = vld [vmem:[#allocation9] sm:$0xff]
    %v892 = vrot.slane %v890, 1
    %v893 = vrot.slane %v890, 2
    %v894 = vrot.slane %v890, 3
    %v895 = vrot.slane %v890, 4
    %v896 = vrot.slane %v890, 5
    %v897 = vrot.slane %v890, 6
    %v898 = vrot.slane %v890, 7
    %v907 = vadd.f32 %v882, %v890
    %v908 = vadd.f32 %v883, %v892
    %v909 = vadd.f32 %v884, %v893
    %v910 = vadd.f32 %v885, %v894
    %v911 = vadd.f32 %v886, %v895
    %v912 = vadd.f32 %v887, %v896
    %v913 = vadd.f32 %v888, %v897
    %v914 = vadd.f32 %v889, %v898
    %v915 = vsub.f32 %v907, 10.0
    %v916 = vsub.f32 %v908, 10.0
    %v917 = vsub.f32 %v909, 10.0
    %v918 = vsub.f32 %v910, 10.0
    %v919 = vsub.f32 %v911, 10.0
    %v920 = vsub.f32 %v912, 10.0
    %v921 = vsub.f32 %v913, 10.0
    %v922 = vsub.f32 %v914, 10.0
    %v923 = vmul.f32 %v915, 1.442695
    %v924 = vpow.pop %v923
    %v925 = vmul.f32 %v916, 1.442695
    %v926 = vpow.pop %v925
    %v927 = vmul.f32 %v917, 1.442695
    %v928 = vpow.pop %v927
    %v929 = vmul.f32 %v918, 1.442695
    %v930 = vpow.pop %v929
    %v931 = vmul.f32 %v919, 1.442695
    %v932 = vpow.pop %v931
    %v933 = vmul.f32 %v920, 1.442695
    %v934 = vpow.pop %v933
    %v935 = vmul.f32 %v921, 1.442695
    %v936 = vpow.pop %v935
    %v937 = vmul.f32 %v922, 1.442695
    %v938 = vpow.pop %v937
    %v947 = vrot.slane %v926, 7
    %vm948 = vcmask 1041409
    %v949 = vsel %vm948, %v947, %v924
    %v950 = vrot.slane %v928, 6
    %vm951 = vcmask 1042434
    %v952 = vsel %vm951, %v950, %v949
    %v953 = vrot.slane %v930, 5
    %vm954 = vcmask 1043459
    %v955 = vsel %vm954, %v953, %v952
    %v956 = vrot.slane %v932, 4
    %vm957 = vcmask 1044484
    %v958 = vsel %vm957, %v956, %v955
    %v959 = vrot.slane %v934, 3
    %vm960 = vcmask 1045509
    %v961 = vsel %vm960, %v959, %v958
    %v962 = vrot.slane %v936, 2
    %vm963 = vcmask 1046534
    %v964 = vsel %vm963, %v962, %v961
    %v965 = vrot.slane %v938, 1
    %vm966 = vcmask 1047559
    %v967 = vsel %vm966, %v965, %v964
    %969 = vst [vmem:[#allocation14] sm:$0xff] %v967
    %v970 = vld [vmem:[#allocation2] sm:$0xff]
    %971 = vadd.xlane.f32.xlu0 %v967
    %v972 = vpop.xlane.xlu0 %971
    %v973 = vadd.f32 %v970, %v972
    %vm974 = vcmask 7168
    %975 = vst.msk [vmem:[#allocation2] sm:$0xff] %vm974, %v973
    %v976 = vld [vmem:[#allocation3] sm:$0xff]
    %v977 = vld [vmem:[#allocation12] sm:$0xff]
    %v978 = vld [vmem:[#allocation12 + $0x8] sm:$0xff]
    %v979 = vld [vmem:[#allocation12 + $0x10] sm:$0xff]
    %v980 = vld [vmem:[#allocation12 + $0x18] sm:$0xff]
    %v981 = vld [vmem:[#allocation12 + $0x20] sm:$0xff]
    %v982 = vld [vmem:[#allocation12 + $0x28] sm:$0xff]
    %v983 = vld [vmem:[#allocation12 + $0x30] sm:$0xff]
    %v984 = vld [vmem:[#allocation12 + $0x38] sm:$0xff]
    %v985 = vld [vmem:[#allocation12 + $0x40] sm:$0xff]
    %v986 = vld [vmem:[#allocation12 + $0x48] sm:$0xff]
    %v987 = vld [vmem:[#allocation12 + $0x50] sm:$0xff]
    %v988 = vld [vmem:[#allocation12 + $0x58] sm:$0xff]
    %v989 = vld [vmem:[#allocation12 + $0x60] sm:$0xff]
    %v990 = vld [vmem:[#allocation12 + $0x68] sm:$0xff]
    %v991 = vld [vmem:[#allocation12 + $0x70] sm:$0xff]
    %v992 = vld [vmem:[#allocation12 + $0x78] sm:$0xff]
    %v993 = vld [vmem:[#allocation12 + $0x80] sm:$0xff]
    %v994 = vld [vmem:[#allocation12 + $0x88] sm:$0xff]
    %v995 = vld [vmem:[#allocation12 + $0x90] sm:$0xff]
    %v996 = vld [vmem:[#allocation12 + $0x98] sm:$0xff]
    %v997 = vld [vmem:[#allocation12 + $0xa0] sm:$0xff]
    %v998 = vld [vmem:[#allocation12 + $0xa8] sm:$0xff]
    %v999 = vld [vmem:[#allocation12 + $0xb0] sm:$0xff]
    %v1000 = vld [vmem:[#allocation12 + $0xb8] sm:$0xff]
    %v1001 = vld [vmem:[#allocation12 + $0xc0] sm:$0xff]
    %v1002 = vld [vmem:[#allocation12 + $0xc8] sm:$0xff]
    %v1003 = vld [vmem:[#allocation12 + $0xd0] sm:$0xff]
    %v1004 = vld [vmem:[#allocation12 + $0xd8] sm:$0xff]
    %v1005 = vld [vmem:[#allocation12 + $0xe0] sm:$0xff]
    %v1006 = vld [vmem:[#allocation12 + $0xe8] sm:$0xff]
    %v1007 = vld [vmem:[#allocation12 + $0xf0] sm:$0xff]
    %v1008 = vld [vmem:[#allocation12 + $0xf8] sm:$0xff]
    %v1009 = vld [vmem:[#allocation12 + $0x100] sm:$0xff]
    %v1010 = vld [vmem:[#allocation12 + $0x108] sm:$0xff]
    %v1011 = vld [vmem:[#allocation12 + $0x110] sm:$0xff]
    %v1012 = vld [vmem:[#allocation12 + $0x118] sm:$0xff]
    %v1013 = vld [vmem:[#allocation12 + $0x120] sm:$0xff]
    %v1014 = vld [vmem:[#allocation12 + $0x128] sm:$0xff]
    %v1015 = vld [vmem:[#allocation12 + $0x130] sm:$0xff]
    %v1016 = vld [vmem:[#allocation12 + $0x138] sm:$0xff]
    %v1017 = vld [vmem:[#allocation12 + $0x140] sm:$0xff]
    %v1018 = vld [vmem:[#allocation12 + $0x148] sm:$0xff]
    %v1019 = vld [vmem:[#allocation12 + $0x150] sm:$0xff]
    %v1020 = vld [vmem:[#allocation12 + $0x158] sm:$0xff]
    %v1021 = vld [vmem:[#allocation12 + $0x160] sm:$0xff]
    %v1022 = vld [vmem:[#allocation12 + $0x168] sm:$0xff]
    %v1023 = vld [vmem:[#allocation12 + $0x170] sm:$0xff]
    %v1024 = vld [vmem:[#allocation12 + $0x178] sm:$0xff]
    %v1025 = vld [vmem:[#allocation12 + $0x180] sm:$0xff]
    %v1026 = vld [vmem:[#allocation12 + $0x188] sm:$0xff]
    %v1027 = vld [vmem:[#allocation12 + $0x190] sm:$0xff]
    %v1028 = vld [vmem:[#allocation12 + $0x198] sm:$0xff]
    %v1029 = vld [vmem:[#allocation12 + $0x1a0] sm:$0xff]
    %v1030 = vld [vmem:[#allocation12 + $0x1a8] sm:$0xff]
    %v1031 = vld [vmem:[#allocation12 + $0x1b0] sm:$0xff]
    %v1032 = vld [vmem:[#allocation12 + $0x1b8] sm:$0xff]
    %v1033 = vld [vmem:[#allocation12 + $0x1c0] sm:$0xff]
    %v1034 = vld [vmem:[#allocation12 + $0x1c8] sm:$0xff]
    %v1035 = vld [vmem:[#allocation12 + $0x1d0] sm:$0xff]
    %v1036 = vld [vmem:[#allocation12 + $0x1d8] sm:$0xff]
    %v1037 = vld [vmem:[#allocation12 + $0x1e0] sm:$0xff]
    %v1038 = vld [vmem:[#allocation12 + $0x1e8] sm:$0xff]
    %v1039 = vld [vmem:[#allocation12 + $0x1f0] sm:$0xff]
    %v1040 = vld [vmem:[#allocation12 + $0x1f8] sm:$0xff]
    %v1041 = vld [vmem:[#allocation12 + $0x200] sm:$0xff]
    %v1042 = vld [vmem:[#allocation12 + $0x208] sm:$0xff]
    %v1043 = vld [vmem:[#allocation12 + $0x210] sm:$0xff]
    %v1044 = vld [vmem:[#allocation12 + $0x218] sm:$0xff]
    %v1045 = vld [vmem:[#allocation12 + $0x220] sm:$0xff]
    %v1046 = vld [vmem:[#allocation12 + $0x228] sm:$0xff]
    %v1047 = vld [vmem:[#allocation12 + $0x230] sm:$0xff]
    %v1048 = vld [vmem:[#allocation12 + $0x238] sm:$0xff]
    %v1049 = vld [vmem:[#allocation12 + $0x240] sm:$0xff]
    %v1050 = vld [vmem:[#allocation12 + $0x248] sm:$0xff]
    %v1051 = vld [vmem:[#allocation12 + $0x250] sm:$0xff]
    %v1052 = vld [vmem:[#allocation12 + $0x258] sm:$0xff]
    %v1053 = vld [vmem:[#allocation12 + $0x260] sm:$0xff]
    %v1054 = vld [vmem:[#allocation12 + $0x268] sm:$0xff]
    %v1055 = vld [vmem:[#allocation12 + $0x270] sm:$0xff]
    %v1056 = vld [vmem:[#allocation12 + $0x278] sm:$0xff]
    %v1057 = vld [vmem:[#allocation12 + $0x280] sm:$0xff]
    %v1058 = vld [vmem:[#allocation12 + $0x288] sm:$0xff]
    %v1059 = vld [vmem:[#allocation12 + $0x290] sm:$0xff]
    %v1060 = vld [vmem:[#allocation12 + $0x298] sm:$0xff]
    %v1061 = vld [vmem:[#allocation12 + $0x2a0] sm:$0xff]
    %v1062 = vld [vmem:[#allocation12 + $0x2a8] sm:$0xff]
    %v1063 = vld [vmem:[#allocation12 + $0x2b0] sm:$0xff]
    %v1064 = vld [vmem:[#allocation12 + $0x2b8] sm:$0xff]
    %v1065 = vld [vmem:[#allocation12 + $0x2c0] sm:$0xff]
    %v1066 = vld [vmem:[#allocation12 + $0x2c8] sm:$0xff]
    %v1067 = vld [vmem:[#allocation12 + $0x2d0] sm:$0xff]
    %v1068 = vld [vmem:[#allocation12 + $0x2d8] sm:$0xff]
    %v1069 = vld [vmem:[#allocation12 + $0x2e0] sm:$0xff]
    %v1070 = vld [vmem:[#allocation12 + $0x2e8] sm:$0xff]
    %v1071 = vld [vmem:[#allocation12 + $0x2f0] sm:$0xff]
    %v1072 = vld [vmem:[#allocation12 + $0x2f8] sm:$0xff]
    %v1073 = vld [vmem:[#allocation12 + $0x300] sm:$0xff]
    %v1074 = vld [vmem:[#allocation12 + $0x308] sm:$0xff]
    %v1075 = vld [vmem:[#allocation12 + $0x310] sm:$0xff]
    %v1076 = vld [vmem:[#allocation12 + $0x318] sm:$0xff]
    %v1077 = vld [vmem:[#allocation12 + $0x320] sm:$0xff]
    %v1078 = vld [vmem:[#allocation12 + $0x328] sm:$0xff]
    %v1079 = vld [vmem:[#allocation12 + $0x330] sm:$0xff]
    %v1080 = vld [vmem:[#allocation12 + $0x338] sm:$0xff]
    %v1081 = vld [vmem:[#allocation12 + $0x340] sm:$0xff]
    %v1082 = vld [vmem:[#allocation12 + $0x348] sm:$0xff]
    %v1083 = vld [vmem:[#allocation12 + $0x350] sm:$0xff]
    %v1084 = vld [vmem:[#allocation12 + $0x358] sm:$0xff]
    %v1085 = vld [vmem:[#allocation12 + $0x360] sm:$0xff]
    %v1086 = vld [vmem:[#allocation12 + $0x368] sm:$0xff]
    %v1087 = vld [vmem:[#allocation12 + $0x370] sm:$0xff]
    %v1088 = vld [vmem:[#allocation12 + $0x378] sm:$0xff]
    %v1089 = vld [vmem:[#allocation12 + $0x380] sm:$0xff]
    %v1090 = vld [vmem:[#allocation12 + $0x388] sm:$0xff]
    %v1091 = vld [vmem:[#allocation12 + $0x390] sm:$0xff]
    %v1092 = vld [vmem:[#allocation12 + $0x398] sm:$0xff]
    %v1093 = vld [vmem:[#allocation12 + $0x3a0] sm:$0xff]
    %v1094 = vld [vmem:[#allocation12 + $0x3a8] sm:$0xff]
    %v1095 = vld [vmem:[#allocation12 + $0x3b0] sm:$0xff]
    %v1096 = vld [vmem:[#allocation12 + $0x3b8] sm:$0xff]
    %v1097 = vld [vmem:[#allocation12 + $0x3c0] sm:$0xff]
    %v1098 = vld [vmem:[#allocation12 + $0x3c8] sm:$0xff]
    %v1099 = vld [vmem:[#allocation12 + $0x3d0] sm:$0xff]
    %v1100 = vld [vmem:[#allocation12 + $0x3d8] sm:$0xff]
    %v1101 = vld [vmem:[#allocation12 + $0x3e0] sm:$0xff]
    %v1102 = vld [vmem:[#allocation12 + $0x3e8] sm:$0xff]
    %v1103 = vld [vmem:[#allocation12 + $0x3f0] sm:$0xff]
    %v1104 = vld [vmem:[#allocation12 + $0x3f8] sm:$0xff]
    %1105 = vmatprep.subr.mxu0 0.0
    %1106 = vmatpush1.msra.mxu0 %v992
    %1107 = vmatprep.subr.mxu0 0.0
    %1108 = vmatpush1.msra.mxu0 %v991
    %1109 = vmatprep.subr.mxu0 0.0
    %1110 = vmatpush1.msra.mxu0 %v990
    %1111 = vmatprep.subr.mxu0 0.0
    %1112 = vmatpush1.msra.mxu0 %v989
    %1113 = vmatprep.subr.mxu0 0.0
    %1114 = vmatpush1.msra.mxu0 %v988
    %1115 = vmatprep.subr.mxu0 0.0
    %1116 = vmatpush1.msra.mxu0 %v987
    %1117 = vmatprep.subr.mxu0 0.0
    %1118 = vmatpush1.msra.mxu0 %v986
    %1119 = vmatprep.subr.mxu0 0.0
    %1120 = vmatpush1.msra.mxu0 %v985
    %1121 = vmatprep.subr.mxu0 0.0
    %1122 = vmatpush1.msra.mxu0 %v984
    %1123 = vmatprep.subr.mxu0 0.0
    %1124 = vmatpush1.msra.mxu0 %v983
    %1125 = vmatprep.subr.mxu0 0.0
    %1126 = vmatpush1.msra.mxu0 %v982
    %1127 = vmatprep.subr.mxu0 0.0
    %1128 = vmatpush1.msra.mxu0 %v981
    %1129 = vmatprep.subr.mxu0 0.0
    %1130 = vmatpush1.msra.mxu0 %v980
    %1131 = vmatprep.subr.mxu0 0.0
    %1132 = vmatpush1.msra.mxu0 %v979
    %1133 = vmatprep.subr.mxu0 0.0
    %1134 = vmatpush1.msra.mxu0 %v978
    %1135 = vmatprep.subr.mxu0 0.0
    %1136 = vmatpush1.msra.mxu0 %v977
    %1137 = vmatprep.subr.mxu0 0.0
    %1138 = vmatpush2.msra.mxu0 0.0
    %1139 = vmatprep.subr.mxu0 0.0
    %1140 = vmatpush2.msra.mxu0 0.0
    %1141 = vmatprep.subr.mxu0 0.0
    %1142 = vmatpush2.msra.mxu0 0.0
    %1143 = vmatprep.subr.mxu0 0.0
    %1144 = vmatpush2.msra.mxu0 0.0
    %1145 = vmatprep.subr.mxu0 0.0
    %1146 = vmatpush2.msra.mxu0 0.0
    %1147 = vmatprep.subr.mxu0 0.0
    %1148 = vmatpush2.msra.mxu0 0.0
    %1149 = vmatprep.subr.mxu0 0.0
    %1150 = vmatpush2.msra.mxu0 0.0
    %1151 = vmatprep.subr.mxu0 0.0
    %1152 = vmatpush2.msra.mxu0 0.0
    %1153 = vmatprep.subr.mxu0 0.0
    %1154 = vmatpush2.msra.mxu0 0.0
    %1155 = vmatprep.subr.mxu0 0.0
    %1156 = vmatpush2.msra.mxu0 0.0
    %1157 = vmatprep.subr.mxu0 0.0
    %1158 = vmatpush2.msra.mxu0 0.0
    %1159 = vmatprep.subr.mxu0 0.0
    %1160 = vmatpush2.msra.mxu0 0.0
    %1161 = vmatprep.subr.mxu0 0.0
    %1162 = vmatpush2.msra.mxu0 0.0
    %1163 = vmatprep.subr.mxu0 0.0
    %1164 = vmatpush2.msra.mxu0 0.0
    %1165 = vmatprep.subr.mxu0 0.0
    %1166 = vmatpush2.msra.mxu0 0.0
    %1167 = vmatprep.subr.mxu0 0.0
    %1168 = vmatpush2.msra.mxu0 0.0
    %1169 = vmatprep.mubr.f32.mxu0 0.0
    %1170 = vmatmul.mubr.f32.gmra.mxu0 %v924
    %v1171 = vpop.f32.mrf.mxu0
    %v1172 = vadd.f32 0.0, %v1171
    %v1173 = vpop.f32.mrf.mxu0
    %1174 = vdwg.mxu0
    %1175 = vmatprep.subr.mxu0 0.0
    %1176 = vmatpush1.msra.mxu0 %v1008
    %1177 = vmatprep.subr.mxu0 0.0
    %1178 = vmatpush1.msra.mxu0 %v1007
    %1179 = vmatprep.subr.mxu0 0.0
    %1180 = vmatpush1.msra.mxu0 %v1006
    %1181 = vmatprep.subr.mxu0 0.0
    %1182 = vmatpush1.msra.mxu0 %v1005
    %1183 = vmatprep.subr.mxu0 0.0
    %1184 = vmatpush1.msra.mxu0 %v1004
    %1185 = vmatprep.subr.mxu0 0.0
    %1186 = vmatpush1.msra.mxu0 %v1003
    %1187 = vmatprep.subr.mxu0 0.0
    %1188 = vmatpush1.msra.mxu0 %v1002
    %1189 = vmatprep.subr.mxu0 0.0
    %1190 = vmatpush1.msra.mxu0 %v1001
    %1191 = vmatprep.subr.mxu0 0.0
    %1192 = vmatpush1.msra.mxu0 %v1000
    %1193 = vmatprep.subr.mxu0 0.0
    %1194 = vmatpush1.msra.mxu0 %v999
    %1195 = vmatprep.subr.mxu0 0.0
    %1196 = vmatpush1.msra.mxu0 %v998
    %1197 = vmatprep.subr.mxu0 0.0
    %1198 = vmatpush1.msra.mxu0 %v997
    %1199 = vmatprep.subr.mxu0 0.0
    %1200 = vmatpush1.msra.mxu0 %v996
    %1201 = vmatprep.subr.mxu0 0.0
    %1202 = vmatpush1.msra.mxu0 %v995
    %1203 = vmatprep.subr.mxu0 0.0
    %1204 = vmatpush1.msra.mxu0 %v994
    %1205 = vmatprep.subr.mxu0 0.0
    %1206 = vmatpush1.msra.mxu0 %v993
    %1207 = vmatprep.subr.mxu0 0.0
    %1208 = vmatpush2.msra.mxu0 0.0
    %1209 = vmatprep.subr.mxu0 0.0
    %1210 = vmatpush2.msra.mxu0 0.0
    %1211 = vmatprep.subr.mxu0 0.0
    %1212 = vmatpush2.msra.mxu0 0.0
    %1213 = vmatprep.subr.mxu0 0.0
    %1214 = vmatpush2.msra.mxu0 0.0
    %1215 = vmatprep.subr.mxu0 0.0
    %1216 = vmatpush2.msra.mxu0 0.0
    %1217 = vmatprep.subr.mxu0 0.0
    %1218 = vmatpush2.msra.mxu0 0.0
    %1219 = vmatprep.subr.mxu0 0.0
    %1220 = vmatpush2.msra.mxu0 0.0
    %1221 = vmatprep.subr.mxu0 0.0
    %1222 = vmatpush2.msra.mxu0 0.0
    %1223 = vmatprep.subr.mxu0 0.0
    %1224 = vmatpush2.msra.mxu0 0.0
    %1225 = vmatprep.subr.mxu0 0.0
    %1226 = vmatpush2.msra.mxu0 0.0
    %1227 = vmatprep.subr.mxu0 0.0
    %1228 = vmatpush2.msra.mxu0 0.0
    %1229 = vmatprep.subr.mxu0 0.0
    %1230 = vmatpush2.msra.mxu0 0.0
    %1231 = vmatprep.subr.mxu0 0.0
    %1232 = vmatpush2.msra.mxu0 0.0
    %1233 = vmatprep.subr.mxu0 0.0
    %1234 = vmatpush2.msra.mxu0 0.0
    %1235 = vmatprep.subr.mxu0 0.0
    %1236 = vmatpush2.msra.mxu0 0.0
    %1237 = vmatprep.subr.mxu0 0.0
    %1238 = vmatpush2.msra.mxu0 0.0
    %1239 = vmatprep.mubr.f32.mxu0 0.0
    %1240 = vmatmul.mubr.f32.gmra.mxu0 %v926
    %v1241 = vpop.f32.mrf.mxu0
    %v1242 = vadd.f32 0.0, %v1241
    %v1243 = vpop.f32.mrf.mxu0
    %1244 = vdwg.mxu0
    %1245 = vmatprep.subr.mxu0 0.0
    %1246 = vmatpush1.msra.mxu0 %v1024
    %1247 = vmatprep.subr.mxu0 0.0
    %1248 = vmatpush1.msra.mxu0 %v1023
    %1249 = vmatprep.subr.mxu0 0.0
    %1250 = vmatpush1.msra.mxu0 %v1022
    %1251 = vmatprep.subr.mxu0 0.0
    %1252 = vmatpush1.msra.mxu0 %v1021
    %1253 = vmatprep.subr.mxu0 0.0
    %1254 = vmatpush1.msra.mxu0 %v1020
    %1255 = vmatprep.subr.mxu0 0.0
    %1256 = vmatpush1.msra.mxu0 %v1019
    %1257 = vmatprep.subr.mxu0 0.0
    %1258 = vmatpush1.msra.mxu0 %v1018
    %1259 = vmatprep.subr.mxu0 0.0
    %1260 = vmatpush1.msra.mxu0 %v1017
    %1261 = vmatprep.subr.mxu0 0.0
    %1262 = vmatpush1.msra.mxu0 %v1016
    %1263 = vmatprep.subr.mxu0 0.0
    %1264 = vmatpush1.msra.mxu0 %v1015
    %1265 = vmatprep.subr.mxu0 0.0
    %1266 = vmatpush1.msra.mxu0 %v1014
    %1267 = vmatprep.subr.mxu0 0.0
    %1268 = vmatpush1.msra.mxu0 %v1013
    %1269 = vmatprep.subr.mxu0 0.0
    %1270 = vmatpush1.msra.mxu0 %v1012
    %1271 = vmatprep.subr.mxu0 0.0
    %1272 = vmatpush1.msra.mxu0 %v1011
    %1273 = vmatprep.subr.mxu0 0.0
    %1274 = vmatpush1.msra.mxu0 %v1010
    %1275 = vmatprep.subr.mxu0 0.0
    %1276 = vmatpush1.msra.mxu0 %v1009
    %1277 = vmatprep.subr.mxu0 0.0
    %1278 = vmatpush2.msra.mxu0 0.0
    %1279 = vmatprep.subr.mxu0 0.0
    %1280 = vmatpush2.msra.mxu0 0.0
    %1281 = vmatprep.subr.mxu0 0.0
    %1282 = vmatpush2.msra.mxu0 0.0
    %1283 = vmatprep.subr.mxu0 0.0
    %1284 = vmatpush2.msra.mxu0 0.0
    %1285 = vmatprep.subr.mxu0 0.0
    %1286 = vmatpush2.msra.mxu0 0.0
    %1287 = vmatprep.subr.mxu0 0.0
    %1288 = vmatpush2.msra.mxu0 0.0
    %1289 = vmatprep.subr.mxu0 0.0
    %1290 = vmatpush2.msra.mxu0 0.0
    %1291 = vmatprep.subr.mxu0 0.0
    %1292 = vmatpush2.msra.mxu0 0.0
    %1293 = vmatprep.subr.mxu0 0.0
    %1294 = vmatpush2.msra.mxu0 0.0
    %1295 = vmatprep.subr.mxu0 0.0
    %1296 = vmatpush2.msra.mxu0 0.0
    %1297 = vmatprep.subr.mxu0 0.0
    %1298 = vmatpush2.msra.mxu0 0.0
    %1299 = vmatprep.subr.mxu0 0.0
    %1300 = vmatpush2.msra.mxu0 0.0
    %1301 = vmatprep.subr.mxu0 0.0
    %1302 = vmatpush2.msra.mxu0 0.0
    %1303 = vmatprep.subr.mxu0 0.0
    %1304 = vmatpush2.msra.mxu0 0.0
    %1305 = vmatprep.subr.mxu0 0.0
    %1306 = vmatpush2.msra.mxu0 0.0
    %1307 = vmatprep.subr.mxu0 0.0
    %1308 = vmatpush2.msra.mxu0 0.0
    %1309 = vmatprep.mubr.f32.mxu0 0.0
    %1310 = vmatmul.mubr.f32.gmra.mxu0 %v928
    %v1311 = vpop.f32.mrf.mxu0
    %v1312 = vadd.f32 0.0, %v1311
    %v1313 = vpop.f32.mrf.mxu0
    %1314 = vdwg.mxu0
    %1315 = vmatprep.subr.mxu0 0.0
    %1316 = vmatpush1.msra.mxu0 %v1040
    %1317 = vmatprep.subr.mxu0 0.0
    %1318 = vmatpush1.msra.mxu0 %v1039
    %1319 = vmatprep.subr.mxu0 0.0
    %1320 = vmatpush1.msra.mxu0 %v1038
    %1321 = vmatprep.subr.mxu0 0.0
    %1322 = vmatpush1.msra.mxu0 %v1037
    %1323 = vmatprep.subr.mxu0 0.0
    %1324 = vmatpush1.msra.mxu0 %v1036
    %1325 = vmatprep.subr.mxu0 0.0
    %1326 = vmatpush1.msra.mxu0 %v1035
    %1327 = vmatprep.subr.mxu0 0.0
    %1328 = vmatpush1.msra.mxu0 %v1034
    %1329 = vmatprep.subr.mxu0 0.0
    %1330 = vmatpush1.msra.mxu0 %v1033
    %1331 = vmatprep.subr.mxu0 0.0
    %1332 = vmatpush1.msra.mxu0 %v1032
    %1333 = vmatprep.subr.mxu0 0.0
    %1334 = vmatpush1.msra.mxu0 %v1031
    %1335 = vmatprep.subr.mxu0 0.0
    %1336 = vmatpush1.msra.mxu0 %v1030
    %1337 = vmatprep.subr.mxu0 0.0
    %1338 = vmatpush1.msra.mxu0 %v1029
    %1339 = vmatprep.subr.mxu0 0.0
    %1340 = vmatpush1.msra.mxu0 %v1028
    %1341 = vmatprep.subr.mxu0 0.0
    %1342 = vmatpush1.msra.mxu0 %v1027
    %1343 = vmatprep.subr.mxu0 0.0
    %1344 = vmatpush1.msra.mxu0 %v1026
    %1345 = vmatprep.subr.mxu0 0.0
    %1346 = vmatpush1.msra.mxu0 %v1025
    %1347 = vmatprep.subr.mxu0 0.0
    %1348 = vmatpush2.msra.mxu0 0.0
    %1349 = vmatprep.subr.mxu0 0.0
    %1350 = vmatpush2.msra.mxu0 0.0
    %1351 = vmatprep.subr.mxu0 0.0
    %1352 = vmatpush2.msra.mxu0 0.0
    %1353 = vmatprep.subr.mxu0 0.0
    %1354 = vmatpush2.msra.mxu0 0.0
    %1355 = vmatprep.subr.mxu0 0.0
    %1356 = vmatpush2.msra.mxu0 0.0
    %1357 = vmatprep.subr.mxu0 0.0
    %1358 = vmatpush2.msra.mxu0 0.0
    %1359 = vmatprep.subr.mxu0 0.0
    %1360 = vmatpush2.msra.mxu0 0.0
    %1361 = vmatprep.subr.mxu0 0.0
    %1362 = vmatpush2.msra.mxu0 0.0
    %1363 = vmatprep.subr.mxu0 0.0
    %1364 = vmatpush2.msra.mxu0 0.0
    %1365 = vmatprep.subr.mxu0 0.0
    %1366 = vmatpush2.msra.mxu0 0.0
    %1367 = vmatprep.subr.mxu0 0.0
    %1368 = vmatpush2.msra.mxu0 0.0
    %1369 = vmatprep.subr.mxu0 0.0
    %1370 = vmatpush2.msra.mxu0 0.0
    %1371 = vmatprep.subr.mxu0 0.0
    %1372 = vmatpush2.msra.mxu0 0.0
    %1373 = vmatprep.subr.mxu0 0.0
    %1374 = vmatpush2.msra.mxu0 0.0
    %1375 = vmatprep.subr.mxu0 0.0
    %1376 = vmatpush2.msra.mxu0 0.0
    %1377 = vmatprep.subr.mxu0 0.0
    %1378 = vmatpush2.msra.mxu0 0.0
    %1379 = vmatprep.mubr.f32.mxu0 0.0
    %1380 = vmatmul.mubr.f32.gmra.mxu0 %v930
    %v1381 = vpop.f32.mrf.mxu0
    %v1382 = vadd.f32 0.0, %v1381
    %v1383 = vpop.f32.mrf.mxu0
    %1384 = vdwg.mxu0
    %1385 = vmatprep.subr.mxu0 0.0
    %1386 = vmatpush1.msra.mxu0 %v1056
    %1387 = vmatprep.subr.mxu0 0.0
    %1388 = vmatpush1.msra.mxu0 %v1055
    %1389 = vmatprep.subr.mxu0 0.0
    %1390 = vmatpush1.msra.mxu0 %v1054
    %1391 = vmatprep.subr.mxu0 0.0
    %1392 = vmatpush1.msra.mxu0 %v1053
    %1393 = vmatprep.subr.mxu0 0.0
    %1394 = vmatpush1.msra.mxu0 %v1052
    %1395 = vmatprep.subr.mxu0 0.0
    %1396 = vmatpush1.msra.mxu0 %v1051
    %1397 = vmatprep.subr.mxu0 0.0
    %1398 = vmatpush1.msra.mxu0 %v1050
    %1399 = vmatprep.subr.mxu0 0.0
    %1400 = vmatpush1.msra.mxu0 %v1049
    %1401 = vmatprep.subr.mxu0 0.0
    %1402 = vmatpush1.msra.mxu0 %v1048
    %1403 = vmatprep.subr.mxu0 0.0
    %1404 = vmatpush1.msra.mxu0 %v1047
    %1405 = vmatprep.subr.mxu0 0.0
    %1406 = vmatpush1.msra.mxu0 %v1046
    %1407 = vmatprep.subr.mxu0 0.0
    %1408 = vmatpush1.msra.mxu0 %v1045
    %1409 = vmatprep.subr.mxu0 0.0
    %1410 = vmatpush1.msra.mxu0 %v1044
    %1411 = vmatprep.subr.mxu0 0.0
    %1412 = vmatpush1.msra.mxu0 %v1043
    %1413 = vmatprep.subr.mxu0 0.0
    %1414 = vmatpush1.msra.mxu0 %v1042
    %1415 = vmatprep.subr.mxu0 0.0
    %1416 = vmatpush1.msra.mxu0 %v1041
    %1417 = vmatprep.subr.mxu0 0.0
    %1418 = vmatpush2.msra.mxu0 0.0
    %1419 = vmatprep.subr.mxu0 0.0
    %1420 = vmatpush2.msra.mxu0 0.0
    %1421 = vmatprep.subr.mxu0 0.0
    %1422 = vmatpush2.msra.mxu0 0.0
    %1423 = vmatprep.subr.mxu0 0.0
    %1424 = vmatpush2.msra.mxu0 0.0
    %1425 = vmatprep.subr.mxu0 0.0
    %1426 = vmatpush2.msra.mxu0 0.0
    %1427 = vmatprep.subr.mxu0 0.0
    %1428 = vmatpush2.msra.mxu0 0.0
    %1429 = vmatprep.subr.mxu0 0.0
    %1430 = vmatpush2.msra.mxu0 0.0
    %1431 = vmatprep.subr.mxu0 0.0
    %1432 = vmatpush2.msra.mxu0 0.0
    %1433 = vmatprep.subr.mxu0 0.0
    %1434 = vmatpush2.msra.mxu0 0.0
    %1435 = vmatprep.subr.mxu0 0.0
    %1436 = vmatpush2.msra.mxu0 0.0
    %1437 = vmatprep.subr.mxu0 0.0
    %1438 = vmatpush2.msra.mxu0 0.0
    %1439 = vmatprep.subr.mxu0 0.0
    %1440 = vmatpush2.msra.mxu0 0.0
    %1441 = vmatprep.subr.mxu0 0.0
    %1442 = vmatpush2.msra.mxu0 0.0
    %1443 = vmatprep.subr.mxu0 0.0
    %1444 = vmatpush2.msra.mxu0 0.0
    %1445 = vmatprep.subr.mxu0 0.0
    %1446 = vmatpush2.msra.mxu0 0.0
    %1447 = vmatprep.subr.mxu0 0.0
    %1448 = vmatpush2.msra.mxu0 0.0
    %1449 = vmatprep.mubr.f32.mxu0 0.0
    %1450 = vmatmul.mubr.f32.gmra.mxu0 %v932
    %v1451 = vpop.f32.mrf.mxu0
    %v1452 = vadd.f32 0.0, %v1451
    %v1453 = vpop.f32.mrf.mxu0
    %1454 = vdwg.mxu0
    %1455 = vmatprep.subr.mxu0 0.0
    %1456 = vmatpush1.msra.mxu0 %v1072
    %1457 = vmatprep.subr.mxu0 0.0
    %1458 = vmatpush1.msra.mxu0 %v1071
    %1459 = vmatprep.subr.mxu0 0.0
    %1460 = vmatpush1.msra.mxu0 %v1070
    %1461 = vmatprep.subr.mxu0 0.0
    %1462 = vmatpush1.msra.mxu0 %v1069
    %1463 = vmatprep.subr.mxu0 0.0
    %1464 = vmatpush1.msra.mxu0 %v1068
    %1465 = vmatprep.subr.mxu0 0.0
    %1466 = vmatpush1.msra.mxu0 %v1067
    %1467 = vmatprep.subr.mxu0 0.0
    %1468 = vmatpush1.msra.mxu0 %v1066
    %1469 = vmatprep.subr.mxu0 0.0
    %1470 = vmatpush1.msra.mxu0 %v1065
    %1471 = vmatprep.subr.mxu0 0.0
    %1472 = vmatpush1.msra.mxu0 %v1064
    %1473 = vmatprep.subr.mxu0 0.0
    %1474 = vmatpush1.msra.mxu0 %v1063
    %1475 = vmatprep.subr.mxu0 0.0
    %1476 = vmatpush1.msra.mxu0 %v1062
    %1477 = vmatprep.subr.mxu0 0.0
    %1478 = vmatpush1.msra.mxu0 %v1061
    %1479 = vmatprep.subr.mxu0 0.0
    %1480 = vmatpush1.msra.mxu0 %v1060
    %1481 = vmatprep.subr.mxu0 0.0
    %1482 = vmatpush1.msra.mxu0 %v1059
    %1483 = vmatprep.subr.mxu0 0.0
    %1484 = vmatpush1.msra.mxu0 %v1058
    %1485 = vmatprep.subr.mxu0 0.0
    %1486 = vmatpush1.msra.mxu0 %v1057
    %1487 = vmatprep.subr.mxu0 0.0
    %1488 = vmatpush2.msra.mxu0 0.0
    %1489 = vmatprep.subr.mxu0 0.0
    %1490 = vmatpush2.msra.mxu0 0.0
    %1491 = vmatprep.subr.mxu0 0.0
    %1492 = vmatpush2.msra.mxu0 0.0
    %1493 = vmatprep.subr.mxu0 0.0
    %1494 = vmatpush2.msra.mxu0 0.0
    %1495 = vmatprep.subr.mxu0 0.0
    %1496 = vmatpush2.msra.mxu0 0.0
    %1497 = vmatprep.subr.mxu0 0.0
    %1498 = vmatpush2.msra.mxu0 0.0
    %1499 = vmatprep.subr.mxu0 0.0
    %1500 = vmatpush2.msra.mxu0 0.0
    %1501 = vmatprep.subr.mxu0 0.0
    %1502 = vmatpush2.msra.mxu0 0.0
    %1503 = vmatprep.subr.mxu0 0.0
    %1504 = vmatpush2.msra.mxu0 0.0
    %1505 = vmatprep.subr.mxu0 0.0
    %1506 = vmatpush2.msra.mxu0 0.0
    %1507 = vmatprep.subr.mxu0 0.0
    %1508 = vmatpush2.msra.mxu0 0.0
    %1509 = vmatprep.subr.mxu0 0.0
    %1510 = vmatpush2.msra.mxu0 0.0
    %1511 = vmatprep.subr.mxu0 0.0
    %1512 = vmatpush2.msra.mxu0 0.0
    %1513 = vmatprep.subr.mxu0 0.0
    %1514 = vmatpush2.msra.mxu0 0.0
    %1515 = vmatprep.subr.mxu0 0.0
    %1516 = vmatpush2.msra.mxu0 0.0
    %1517 = vmatprep.subr.mxu0 0.0
    %1518 = vmatpush2.msra.mxu0 0.0
    %1519 = vmatprep.mubr.f32.mxu0 0.0
    %1520 = vmatmul.mubr.f32.gmra.mxu0 %v934
    %v1521 = vpop.f32.mrf.mxu0
    %v1522 = vadd.f32 0.0, %v1521
    %v1523 = vpop.f32.mrf.mxu0
    %1524 = vdwg.mxu0
    %1525 = vmatprep.subr.mxu0 0.0
    %1526 = vmatpush1.msra.mxu0 %v1088
    %1527 = vmatprep.subr.mxu0 0.0
    %1528 = vmatpush1.msra.mxu0 %v1087
    %1529 = vmatprep.subr.mxu0 0.0
    %1530 = vmatpush1.msra.mxu0 %v1086
    %1531 = vmatprep.subr.mxu0 0.0
    %1532 = vmatpush1.msra.mxu0 %v1085
    %1533 = vmatprep.subr.mxu0 0.0
    %1534 = vmatpush1.msra.mxu0 %v1084
    %1535 = vmatprep.subr.mxu0 0.0
    %1536 = vmatpush1.msra.mxu0 %v1083
    %1537 = vmatprep.subr.mxu0 0.0
    %1538 = vmatpush1.msra.mxu0 %v1082
    %1539 = vmatprep.subr.mxu0 0.0
    %1540 = vmatpush1.msra.mxu0 %v1081
    %1541 = vmatprep.subr.mxu0 0.0
    %1542 = vmatpush1.msra.mxu0 %v1080
    %1543 = vmatprep.subr.mxu0 0.0
    %1544 = vmatpush1.msra.mxu0 %v1079
    %1545 = vmatprep.subr.mxu0 0.0
    %1546 = vmatpush1.msra.mxu0 %v1078
    %1547 = vmatprep.subr.mxu0 0.0
    %1548 = vmatpush1.msra.mxu0 %v1077
    %1549 = vmatprep.subr.mxu0 0.0
    %1550 = vmatpush1.msra.mxu0 %v1076
    %1551 = vmatprep.subr.mxu0 0.0
    %1552 = vmatpush1.msra.mxu0 %v1075
    %1553 = vmatprep.subr.mxu0 0.0
    %1554 = vmatpush1.msra.mxu0 %v1074
    %1555 = vmatprep.subr.mxu0 0.0
    %1556 = vmatpush1.msra.mxu0 %v1073
    %1557 = vmatprep.subr.mxu0 0.0
    %1558 = vmatpush2.msra.mxu0 0.0
    %1559 = vmatprep.subr.mxu0 0.0
    %1560 = vmatpush2.msra.mxu0 0.0
    %1561 = vmatprep.subr.mxu0 0.0
    %1562 = vmatpush2.msra.mxu0 0.0
    %1563 = vmatprep.subr.mxu0 0.0
    %1564 = vmatpush2.msra.mxu0 0.0
    %1565 = vmatprep.subr.mxu0 0.0
    %1566 = vmatpush2.msra.mxu0 0.0
    %1567 = vmatprep.subr.mxu0 0.0
    %1568 = vmatpush2.msra.mxu0 0.0
    %1569 = vmatprep.subr.mxu0 0.0
    %1570 = vmatpush2.msra.mxu0 0.0
    %1571 = vmatprep.subr.mxu0 0.0
    %1572 = vmatpush2.msra.mxu0 0.0
    %1573 = vmatprep.subr.mxu0 0.0
    %1574 = vmatpush2.msra.mxu0 0.0
    %1575 = vmatprep.subr.mxu0 0.0
    %1576 = vmatpush2.msra.mxu0 0.0
    %1577 = vmatprep.subr.mxu0 0.0
    %1578 = vmatpush2.msra.mxu0 0.0
    %1579 = vmatprep.subr.mxu0 0.0
    %1580 = vmatpush2.msra.mxu0 0.0
    %1581 = vmatprep.subr.mxu0 0.0
    %1582 = vmatpush2.msra.mxu0 0.0
    %1583 = vmatprep.subr.mxu0 0.0
    %1584 = vmatpush2.msra.mxu0 0.0
    %1585 = vmatprep.subr.mxu0 0.0
    %1586 = vmatpush2.msra.mxu0 0.0
    %1587 = vmatprep.subr.mxu0 0.0
    %1588 = vmatpush2.msra.mxu0 0.0
    %1589 = vmatprep.mubr.f32.mxu0 0.0
    %1590 = vmatmul.mubr.f32.gmra.mxu0 %v936
    %v1591 = vpop.f32.mrf.mxu0
    %v1592 = vadd.f32 0.0, %v1591
    %v1593 = vpop.f32.mrf.mxu0
    %1594 = vdwg.mxu0
    %1595 = vmatprep.subr.mxu0 0.0
    %1596 = vmatpush1.msra.mxu0 %v1104
    %1597 = vmatprep.subr.mxu0 0.0
    %1598 = vmatpush1.msra.mxu0 %v1103
    %1599 = vmatprep.subr.mxu0 0.0
    %1600 = vmatpush1.msra.mxu0 %v1102
    %1601 = vmatprep.subr.mxu0 0.0
    %1602 = vmatpush1.msra.mxu0 %v1101
    %1603 = vmatprep.subr.mxu0 0.0
    %1604 = vmatpush1.msra.mxu0 %v1100
    %1605 = vmatprep.subr.mxu0 0.0
    %1606 = vmatpush1.msra.mxu0 %v1099
    %1607 = vmatprep.subr.mxu0 0.0
    %1608 = vmatpush1.msra.mxu0 %v1098
    %1609 = vmatprep.subr.mxu0 0.0
    %1610 = vmatpush1.msra.mxu0 %v1097
    %1611 = vmatprep.subr.mxu0 0.0
    %1612 = vmatpush1.msra.mxu0 %v1096
    %1613 = vmatprep.subr.mxu0 0.0
    %1614 = vmatpush1.msra.mxu0 %v1095
    %1615 = vmatprep.subr.mxu0 0.0
    %1616 = vmatpush1.msra.mxu0 %v1094
    %1617 = vmatprep.subr.mxu0 0.0
    %1618 = vmatpush1.msra.mxu0 %v1093
    %1619 = vmatprep.subr.mxu0 0.0
    %1620 = vmatpush1.msra.mxu0 %v1092
    %1621 = vmatprep.subr.mxu0 0.0
    %1622 = vmatpush1.msra.mxu0 %v1091
    %1623 = vmatprep.subr.mxu0 0.0
    %1624 = vmatpush1.msra.mxu0 %v1090
    %1625 = vmatprep.subr.mxu0 0.0
    %1626 = vmatpush1.msra.mxu0 %v1089
    %1627 = vmatprep.subr.mxu0 0.0
    %1628 = vmatpush2.msra.mxu0 0.0
    %1629 = vmatprep.subr.mxu0 0.0
    %1630 = vmatpush2.msra.mxu0 0.0
    %1631 = vmatprep.subr.mxu0 0.0
    %1632 = vmatpush2.msra.mxu0 0.0
    %1633 = vmatprep.subr.mxu0 0.0
    %1634 = vmatpush2.msra.mxu0 0.0
    %1635 = vmatprep.subr.mxu0 0.0
    %1636 = vmatpush2.msra.mxu0 0.0
    %1637 = vmatprep.subr.mxu0 0.0
    %1638 = vmatpush2.msra.mxu0 0.0
    %1639 = vmatprep.subr.mxu0 0.0
    %1640 = vmatpush2.msra.mxu0 0.0
    %1641 = vmatprep.subr.mxu0 0.0
    %1642 = vmatpush2.msra.mxu0 0.0
    %1643 = vmatprep.subr.mxu0 0.0
    %1644 = vmatpush2.msra.mxu0 0.0
    %1645 = vmatprep.subr.mxu0 0.0
    %1646 = vmatpush2.msra.mxu0 0.0
    %1647 = vmatprep.subr.mxu0 0.0
    %1648 = vmatpush2.msra.mxu0 0.0
    %1649 = vmatprep.subr.mxu0 0.0
    %1650 = vmatpush2.msra.mxu0 0.0
    %1651 = vmatprep.subr.mxu0 0.0
    %1652 = vmatpush2.msra.mxu0 0.0
    %1653 = vmatprep.subr.mxu0 0.0
    %1654 = vmatpush2.msra.mxu0 0.0
    %1655 = vmatprep.subr.mxu0 0.0
    %1656 = vmatpush2.msra.mxu0 0.0
    %1657 = vmatprep.subr.mxu0 0.0
    %1658 = vmatpush2.msra.mxu0 0.0
    %1659 = vmatprep.mubr.f32.mxu0 0.0
    %1660 = vmatmul.mubr.f32.gmra.mxu0 %v938
    %v1661 = vpop.f32.mrf.mxu0
    %v1662 = vadd.f32 0.0, %v1661
    %v1663 = vpop.f32.mrf.mxu0
    %1664 = vdwg.mxu0
    %v1673 = vrot.slane %v1242, 7
    %v1674 = vsel %vm948, %v1673, %v1172
    %v1675 = vrot.slane %v1312, 6
    %v1676 = vsel %vm951, %v1675, %v1674
    %v1677 = vrot.slane %v1382, 5
    %v1678 = vsel %vm954, %v1677, %v1676
    %v1679 = vrot.slane %v1452, 4
    %v1680 = vsel %vm957, %v1679, %v1678
    %v1681 = vrot.slane %v1522, 3
    %v1682 = vsel %vm960, %v1681, %v1680
    %v1683 = vrot.slane %v1592, 2
    %v1684 = vsel %vm963, %v1683, %v1682
    %v1685 = vrot.slane %v1662, 1
    %v1686 = vsel %vm966, %v1685, %v1684
    %v1688 = vadd.f32 %v976, %v1686
    %1689 = vst [vmem:[#allocation3] sm:$0xff] %v1688
    // Predicated region
    $region46: #{tpu_custom_call.1} parent=1 // pred_check
      %p1690 = pneg %p87
    $region47: #{tpu_custom_call.1} parent=1 // pred_check_branch
      %1692 = sbr.rel (%p1690) target = $region49
    $region48: #{tpu_custom_call.1} parent=1 // pred_region
      %v1693 = vld [vmem:[#allocation2] sm:$0xff]
      %v1694 = vmax.f32 %v1693, 1e-30
      %v1695 = vrcp.pop %v1694
      %v1696 = vmul.f32 1.0, %v1695
      %v1697 = vld [vmem:[#allocation3] sm:$0xff]
      %1699 = vset.pattern.permute.xlu0 0
      %1700 = vperm.xlu0 %1699, %v1696
      %v1701 = vpop.permute.xlu0 %1700
      %v1703 = vmul.f32 %v1697, %v1701
      %1704 = vst [vmem:[#allocation13] sm:$0xff] %v1703
      %1705 = vst [vmem:[#allocation16] sm:$0xff] %v1701
    $region49: #{tpu_custom_call.1} parent=1 // pred_fallthru
      _
    // Predicated region
    $region50: #{tpu_custom_call.1} parent=1 // pred_check
      _
    $region51: #{tpu_custom_call.1} parent=1 // pred_check_branch
      %1707 = sbr.rel (0) target = $region53
    $region52: #{tpu_custom_call.1} parent=1 // pred_region
      %s1709 = ssub.s32 128, 128
      %1710 = vsyncadd [#allocation6], %s1709
      %s1712 = sshll.u32 [#allocation13], 4
      %s1713 = int_to_ptr.vmem [resolvable:$true] %s1712
      %1715 = dma.vmem_to_hbm [thread:$0]  %s1713, 128, %s5, [#allocation6]
    $region53: #{tpu_custom_call.1} parent=1 // pred_fallthru
      _
    // Predicated region
    $region54: #{tpu_custom_call.1} parent=1 // pred_check
      _
    $region55: #{tpu_custom_call.1} parent=1 // pred_check_branch
      %1717 = sbr.rel (0) target = $region57
    $region56: #{tpu_custom_call.1} parent=1 // pred_region
      %s1719 = ssub.s32 128, 128
      %1720 = vsyncadd [#allocation15], %s1719
      %s1722 = sshll.u32 [#allocation14], 4
      %s1723 = int_to_ptr.vmem [resolvable:$true] %s1722
      %1725 = dma.vmem_to_hbm [thread:$0]  %s1723, 128, %s6, [#allocation15]
    $region57: #{tpu_custom_call.1} parent=1 // pred_fallthru
      _
    // Predicated region
    $region58: #{tpu_custom_call.1} parent=1 // pred_check
      _
    $region59: #{tpu_custom_call.1} parent=1 // pred_check_branch
      %1727 = sbr.rel (0) target = $region61
    $region60: #{tpu_custom_call.1} parent=1 // pred_region
      %s1729 = ssub.s32 128, 128
      %1730 = vsyncadd [#allocation15], %s1729
      %s1732 = sshll.u32 [#allocation16], 4
      %s1733 = int_to_ptr.vmem [resolvable:$true] %s1732
      %1735 = dma.vmem_to_hbm [thread:$0]  %s1733, 128, %s7, [#allocation15]
    $region61: #{tpu_custom_call.1} parent=1 // pred_fallthru
      _
    // Predicated region
    $region62: #{tpu_custom_call.1} parent=1 // pred_check
      _
    $region63: #{tpu_custom_call.1} parent=1 // pred_check_branch
      %1737 = sbr.rel (0) target = $region65
    $region64: #{tpu_custom_call.1} parent=1 // pred_region
      %1738 = dma.done [#allocation6], 128
    $region65: #{tpu_custom_call.1} parent=1 // pred_fallthru
      _
    // Predicated region
    $region66: #{tpu_custom_call.1} parent=1 // pred_check
      _
    $region67: #{tpu_custom_call.1} parent=1 // pred_check_branch
      %1740 = sbr.rel (0) target = $region69
    $region68: #{tpu_custom_call.1} parent=1 // pred_region
      %1741 = dma.done [#allocation15], 128
    $region69: #{tpu_custom_call.1} parent=1 // pred_fallthru
      _
    // Predicated region
    $region70: #{tpu_custom_call.1} parent=1 // pred_check
      _
    $region71: #{tpu_custom_call.1} parent=1 // pred_check_branch
      %1743 = sbr.rel (0) target = $region73
    $region72: #{tpu_custom_call.1} parent=1 // pred_region
      %1744 = dma.done [#allocation15], 128
    $region73: #{tpu_custom_call.1} parent=1 // pred_fallthru
      _
    %1745 = vsyncpa [#allocation5], 1
    %1746 = vsyncpa [#allocation8], 1
    %1747 = vsyncpa [#allocation11], 1
    %1748 = vsyncpa [#allocation6], 1
    %1749 = vsyncpa [#allocation15], 1

</llo_original>
